<compile_context>
chip_gen: v7x
topology: tpu7x:2x2x1
jax: 0.10.0
libtpu: 0.0.40
codegen_flags: <defaults>
</compile_context>

<pallas_src>
import math

import jax
import jax.numpy as jnp
from jax.experimental import pallas as pl
from jax.experimental.pallas import tpu as pltpu

EMBED = 32
HEADS = 4
HEAD_DIM = EMBED // HEADS


def copy_attention_kernel(dec_ref, enc_ref, mask_ref, tok_ref, outdist_ref,
                          wq_ref, bq_ref, wkg_ref, bkg_ref, bg_ref,
                          out_ref, alpha_sc, cdist_sc):
    # Blocks:
    #   dec_ref:(BB,T,E) enc_ref:(BB,S,E) mask_ref:(BB,1,S) tok_ref:(BB,S,1)
    #   outdist_ref/out_ref:(BB,T,TV)
    #   wq:(E,E) bq:(1,E) wkg:(E,E+H) bkg:(1,E+H) bg:(1,1)
    #   scratch: alpha_sc:(BB,T,1) cdist_sc:(BB,T,S)   (persist across vocab tiles)
    BB, T, E = dec_ref.shape
    S = enc_ref.shape[1]
    TV = outdist_ref.shape[2]
    H, HD = HEADS, HEAD_DIM
    j = pl.program_id(1)                                   # vocab-tile index

    # ---- attention + gate: computed once per batch block, cached in scratch
    @pl.when(j == 0)
    def _():
        dec = dec_ref[...]                                 # (BB,T,E)
        enc = enc_ref[...]                                 # (BB,S,E)

        # fused, flattened projections (single MXU pass over BB*T / BB*S rows)
        q = (jnp.dot(dec.reshape(BB * T, E), wq_ref[...],
                     preferred_element_type=jnp.float32)
             + bq_ref[...]).reshape(BB, T, E)
        kg = jnp.dot(enc.reshape(BB * S, E), wkg_ref[...],
                     preferred_element_type=jnp.float32) + bkg_ref[...]   # (BB*S,E+H)
        k = kg[:, :E].reshape(BB, S, E)
        gv = kg[:, E:E + H].reshape(BB, S, H)  # folded value->out_proj->gate proj.

        # key_padding_mask: 1.0 == pad position -> large negative logit
        neg_bias = mask_ref[...] * jnp.float32(-1e30)      # (BB,1,S)
        scale = jnp.float32(1.0 / math.sqrt(HD))

        attn_sum = jnp.zeros((BB, T, S), jnp.float32)
        gate_acc = jnp.zeros((BB, T, 1), jnp.float32)
        for h in range(H):                                 # static unroll over heads
            qh = q[:, :, h * HD:(h + 1) * HD] * scale      # (BB,T,HD)
            kh = k[:, :, h * HD:(h + 1) * HD]              # (BB,S,HD)
            s = jax.lax.dot_general(qh, kh, (((2,), (2,)), ((0,), (0,))),
                                    preferred_element_type=jnp.float32)  # (BB,T,S)
            s = s + neg_bias
            s = s - jnp.max(s, axis=-1, keepdims=True)
            e = jnp.exp(s)
            p = e * pl.reciprocal(jnp.sum(e, axis=-1, keepdims=True), approx=True)
            attn_sum = attn_sum + p
            # gate-logit contribution: p_h @ (v_h @ wo_h @ wa^T), folded into gv
            gvh = gv[:, :, h]                              # (BB,S)
            gate_acc = gate_acc + jnp.sum(p * gvh[:, None, :], axis=-1, keepdims=True)

        alpha = jax.nn.sigmoid(gate_acc + bg_ref[...])     # (BB,T,1)
        alpha_sc[...] = alpha
        # fold the 1/H head-average into the (1 - alpha) scale
        cdist_sc[...] = ((1.0 - alpha) * jnp.float32(1.0 / H)) * attn_sum

    alpha = alpha_sc[...]                                  # (BB,T,1)
    copy_dist = cdist_sc[...]                              # (BB,T,S)

    # ---- scatter_add over the current vocab tile == copy_dist @ onehot(tok)
    tok = tok_ref[...]                                     # (BB,S,1) int32
    cols = jax.lax.broadcasted_iota(jnp.int32, (BB, S, TV), 2) + j * TV
    onehot = (cols == tok).astype(jnp.float32)             # (BB,S,TV)
    scat = jax.lax.dot_general(copy_dist, onehot, (((2,), (1,)), ((0,), (0,))),
                               preferred_element_type=jnp.float32)       # (BB,T,TV)
    out_ref[...] = alpha * outdist_ref[...] + scat


def _round_up(x, m):
    return (x + m - 1) // m * m


def copy_attention(encoder_hidden, src_tokens, key_padding_mask,
                   decoder_hidden, out_distribution, params):
    """encoder_hidden:(S,B,E) src_tokens:(S,B) key_padding_mask:(B,S) bool
       decoder_hidden:(T,B,E) out_distribution:(B,T,V) -> (B,T,V)"""
    S, B, E = encoder_hidden.shape
    T = decoder_hidden.shape[0]
    V = out_distribution.shape[-1]
    H, HD = HEADS, HEAD_DIM
    assert E == EMBED

    # Lane-dense vocab tiling: pad V to a multiple of the tile (multiple of 128).
    TV = 512 if V > 512 else 128
    Vp = _round_up(V, TV)
    # Batch block: amortize per-grid-step overhead and fill MXU rows.
    BB = next(c for c in (8, 4, 2, 1) if B % c == 0)

    enc = jnp.transpose(encoder_hidden, (1, 0, 2)).astype(jnp.float32)      # (B,S,E)
    dec = jnp.transpose(decoder_hidden, (1, 0, 2)).astype(jnp.float32)      # (B,T,E)
    mask = key_padding_mask.astype(jnp.float32)[:, None, :]                 # (B,1,S)
    tok = jnp.transpose(src_tokens, (1, 0)).astype(jnp.int32)[:, :, None]   # (B,S,1)
    outd = out_distribution.astype(jnp.float32)                             # (B,T,V)
    if Vp != V:
        outd = jnp.pad(outd, ((0, 0), (0, 0), (0, Vp - V)))

    wq, wk, wv, bq, bk, bv, wo, bo, wa, ba = params
    # Fold out_proj + copy-gate: gate = ctx @ (wo @ wa^T) + (bo @ wa^T + ba)
    w_g = wo @ wa.T                                                          # (E,1)
    b_g = bo @ wa.T + ba                                                     # (1,1)
    # Fold the value projection into the gate (ctx feeds only the gate):
    #   ctx @ w_g = sum_h p_h @ (enc @ (wv_h @ w_g_h) + bv_h @ w_g_h)
    w_gv = jnp.einsum('ehd,hd->eh', wv.reshape(E, H, HD), w_g.reshape(H, HD))        # (E,H)
    b_gv = jnp.einsum('hd,hd->h', bv.reshape(H, HD), w_g.reshape(H, HD))[None, :]    # (1,H)
    w_kg = jnp.concatenate([wk, w_gv], axis=1)                               # (E, E+H)
    b_kg = jnp.concatenate([bk, b_gv], axis=1)                               # (1, E+H)

    def full_spec(a):
        nd = a.ndim
        return pl.BlockSpec(a.shape, lambda i, j, _nd=nd: (0,) * _nd)

    in_specs = [
        pl.BlockSpec((BB, T, E), lambda i, j: (i, 0, 0)),    # dec   (resident over j)
        pl.BlockSpec((BB, S, E), lambda i, j: (i, 0, 0)),    # enc   (resident over j)
        pl.BlockSpec((BB, 1, S), lambda i, j: (i, 0, 0)),    # mask  (resident over j)
        pl.BlockSpec((BB, S, 1), lambda i, j: (i, 0, 0)),    # tokens
        pl.BlockSpec((BB, T, TV), lambda i, j: (i, 0, j)),   # outDistribution tile
        full_spec(wq), full_spec(bq),
        full_spec(w_kg), full_spec(b_kg), full_spec(b_g),
    ]
    out_spec = pl.BlockSpec((BB, T, TV), lambda i, j: (i, 0, j))

    out = pl.pallas_call(
        copy_attention_kernel,
        out_shape=jax.ShapeDtypeStruct((B, T, Vp), jnp.float32),
        grid_spec=pltpu.PrefetchScalarGridSpec(
            num_scalar_prefetch=0,
            grid=(B // BB, Vp // TV),
            in_specs=in_specs,
            out_specs=out_spec,
            scratch_shapes=[pltpu.VMEM((BB, T, 1), jnp.float32),   # alpha cache
                            pltpu.VMEM((BB, T, S), jnp.float32)]), # copy_dist cache
        # Batch blocks are fully independent -> "parallel" (megacore sharding on
        # v7x).  The vocab axis carries the cached attention through scratch
        # (computed at j == 0) -> must stay "arbitrary" (sequential).
        compiler_params=pltpu.CompilerParams(
            dimension_semantics=("parallel", "arbitrary")),
    )(dec, enc, mask, tok, outd, wq, bq, w_kg, b_kg, b_g)

    return out[:, :, :V]


def reference(encoder_hidden, src_tokens, key_padding_mask,
              decoder_hidden, out_distribution, params):
    wq, wk, wv, bq, bk, bv, wo, bo, wa, ba = params
    enc = jnp.transpose(encoder_hidden, (1, 0, 2))
    dec = jnp.transpose(decoder_hidden, (1, 0, 2))
    B, S, E = enc.shape
    T = dec.shape[1]
    V = out_distribution.shape[-1]
    H, HD = HEADS, HEAD_DIM
    q = dec @ wq + bq
    k = enc @ wk + bk
    v = enc @ wv + bv
    qh = q.reshape(B, T, H, HD)
    kh = k.reshape(B, S, H, HD)
    vh = v.reshape(B, S, H, HD)
    scores = jnp.einsum('bthd,bshd->bhts', qh, kh) / math.sqrt(HD)
    scores = scores + jnp.where(key_padding_mask, -1e30, 0.0)[:, None, None, :]
    p = jax.nn.softmax(scores, axis=-1)
    copy_attn = p.mean(axis=1)
    ctx = jnp.einsum('bhts,bshd->bthd', p, vh).reshape(B, T, E)
    x_copy = ctx @ wo + bo
    alpha = jax.nn.sigmoid(jnp.sum(x_copy * wa, axis=-1, keepdims=True) + ba)
    composite = alpha * out_distribution
    copy_dist = (1 - alpha) * copy_attn
    tok = jnp.transpose(src_tokens, (1, 0))
    onehot = (tok[:, :, None] == jnp.arange(V)[None, None, :]).astype(jnp.float32)
    return composite + jnp.einsum('bts,bsv->btv', copy_dist, onehot)


if __name__ == "__main__":
    B, S, T, V = 2, 8, 8, 16
    E = EMBED
    key = jax.random.PRNGKey(0)
    ks = jax.random.split(key, 14)

    encoder_hidden = jax.random.normal(ks[0], (S, B, E), jnp.float32)
    decoder_hidden = jax.random.normal(ks[1], (T, B, E), jnp.float32)
    src_tokens = jax.random.randint(ks[2], (S, B), 0, V, jnp.int32)
    lengths = jnp.array([S, S - 3], jnp.int32)
    key_padding_mask = jnp.arange(S)[None, :] >= lengths[:, None]           # (B,S) bool
    out_distribution = jax.nn.softmax(
        jax.random.normal(ks[3], (B, T, V), jnp.float32), axis=-1)

    def init(k, shape, scale=0.05):
        return scale * jax.random.normal(k, shape, jnp.float32)

    params = (
        init(ks[4], (E, E)),   # Wq
        init(ks[5], (E, E)),   # Wk
        init(ks[6], (E, E)),   # Wv
        init(ks[7], (1, E)),   # bq
        init(ks[8], (1, E)),   # bk
        init(ks[9], (1, E)),   # bv
        init(ks[10], (E, E)),  # out_proj weight
        init(ks[11], (1, E)),  # out_proj bias
        init(ks[12], (1, E)),  # copyAlphaLinear weight
        init(ks[13], (1, 1)),  # copyAlphaLinear bias
    )

    out = copy_attention(encoder_hidden, src_tokens, key_padding_mask,
                         decoder_hidden, out_distribution, params)
    out = jax.block_until_ready(out)

    ref = reference(encoder_hidden, src_tokens, key_padding_mask,
                    decoder_hidden, out_distribution, params)
    assert out.shape == (B, T, V)
    # tolerance accounts for approx-EUP reciprocal in the in-kernel softmax
    assert bool(jnp.allclose(out, ref, rtol=2e-3, atol=2e-3)), "mismatch vs reference"
    print("KERNEL_OK")
</pallas_src>

<mosaic_0001>
module attributes {stable_mosaic.version = 11 : i64} {
  func.func @copy_attention_kernel(%arg0: i32, %arg1: i32, %arg2: memref<2x8x32xf32, #tpu.memory_space<vmem>>, %arg3: memref<2x8x32xf32, #tpu.memory_space<vmem>>, %arg4: memref<2x1x8xf32, #tpu.memory_space<vmem>>, %arg5: memref<2x8x1xi32, #tpu.memory_space<vmem>>, %arg6: memref<2x8x128xf32, #tpu.memory_space<vmem>>, %arg7: memref<32x32xf32, #tpu.memory_space<vmem>>, %arg8: memref<1x32xf32, #tpu.memory_space<vmem>>, %arg9: memref<32x36xf32, #tpu.memory_space<vmem>>, %arg10: memref<1x36xf32, #tpu.memory_space<vmem>>, %arg11: memref<1x1xf32, #tpu.memory_space<vmem>>, %arg12: memref<2x8x128xf32, #tpu.memory_space<vmem>>, %arg13: memref<2x8x1xf32, #tpu.memory_space<vmem>>, %arg14: memref<2x8x8xf32, #tpu.memory_space<vmem>>) attributes {dimension_semantics = [#tpu.dimension_semantics<parallel>, #tpu.dimension_semantics<arbitrary>], iteration_bounds = array<i64: 1, 1>, scalar_prefetch = 0 : i64, scratch_operands = 2 : i64, tpu.core_type = #tpu.core_type<tc>, window_params = [{transform_indices = @transform_0, window_bounds = array<i64: 2, 8, 32>}, {transform_indices = @transform_1, window_bounds = array<i64: 2, 8, 32>}, {transform_indices = @transform_2, window_bounds = array<i64: 2, 1, 8>}, {transform_indices = @transform_3, window_bounds = array<i64: 2, 8, 1>}, {transform_indices = @transform_4, window_bounds = array<i64: 2, 8, 128>}, {pipeline_mode = #tpu.pipeline_mode<synchronous>, transform_indices = @transform_5, window_bounds = array<i64: 32, 32>}, {pipeline_mode = #tpu.pipeline_mode<synchronous>, transform_indices = @transform_6, window_bounds = array<i64: 1, 32>}, {pipeline_mode = #tpu.pipeline_mode<synchronous>, transform_indices = @transform_7, window_bounds = array<i64: 32, 36>}, {pipeline_mode = #tpu.pipeline_mode<synchronous>, transform_indices = @transform_8, window_bounds = array<i64: 1, 36>}, {pipeline_mode = #tpu.pipeline_mode<synchronous>, transform_indices = @transform_9, window_bounds = array<i64: 1, 1>}, {transform_indices = @transform_10, window_bounds = array<i64: 2, 8, 128>}]} {
    %c0_i32 = arith.constant 0 : i32
    %0 = arith.cmpi eq, %arg1, %c0_i32 : i32
    %1 = arith.extui %0 : i1 to i32
    %c0_i32_0 = arith.constant 0 : i32
    %2 = arith.cmpi ne, %1, %c0_i32_0 : i32
    scf.if %2 {
      %c0_15 = arith.constant 0 : index
      %c0_16 = arith.constant 0 : index
      %c0_17 = arith.constant 0 : index
      %20 = vector.load %arg2[%c0_15, %c0_16, %c0_17] : memref<2x8x32xf32, #tpu.memory_space<vmem>>, vector<2x8x32xf32>
      %c0_18 = arith.constant 0 : index
      %c0_19 = arith.constant 0 : index
      %c0_20 = arith.constant 0 : index
      %21 = vector.load %arg3[%c0_18, %c0_19, %c0_20] : memref<2x8x32xf32, #tpu.memory_space<vmem>>, vector<2x8x32xf32>
      %22 = vector.shape_cast %20 : vector<2x8x32xf32> to vector<16x32xf32>
      %c0_21 = arith.constant 0 : index
      %c0_22 = arith.constant 0 : index
      %23 = vector.load %arg7[%c0_21, %c0_22] : memref<32x32xf32, #tpu.memory_space<vmem>>, vector<32x32xf32>
      %cst_23 = arith.constant dense<0.000000e+00> : vector<16x32xf32>
      %24 = tpu.matmul %22, %23, %cst_23 {dimension_numbers = #tpu.dot_dimension_numbers<[1], [0], [0], [1], [0, 0, 1, 1], [], []>} : vector<16x32xf32>, vector<32x32xf32>, vector<16x32xf32> -> vector<16x32xf32>
      %c0_24 = arith.constant 0 : index
      %c0_25 = arith.constant 0 : index
      %25 = vector.load %arg8[%c0_24, %c0_25] : memref<1x32xf32, #tpu.memory_space<vmem>>, vector<1x32xf32>
      %26 = vector.broadcast %25 : vector<1x32xf32> to vector<16x32xf32>
      %27 = arith.addf %24, %26 : vector<16x32xf32>
      %28 = vector.shape_cast %27 : vector<16x32xf32> to vector<2x8x32xf32>
      %29 = vector.shape_cast %21 : vector<2x8x32xf32> to vector<16x32xf32>
      %c0_26 = arith.constant 0 : index
      %c0_27 = arith.constant 0 : index
      %30 = vector.load %arg9[%c0_26, %c0_27] : memref<32x36xf32, #tpu.memory_space<vmem>>, vector<32x36xf32>
      %cst_28 = arith.constant dense<0.000000e+00> : vector<16x36xf32>
      %31 = tpu.matmul %29, %30, %cst_28 {dimension_numbers = #tpu.dot_dimension_numbers<[1], [0], [0], [1], [0, 0, 1, 1], [], []>} : vector<16x32xf32>, vector<32x36xf32>, vector<16x36xf32> -> vector<16x36xf32>
      %c0_29 = arith.constant 0 : index
      %c0_30 = arith.constant 0 : index
      %32 = vector.load %arg10[%c0_29, %c0_30] : memref<1x36xf32, #tpu.memory_space<vmem>>, vector<1x36xf32>
      %33 = vector.broadcast %32 : vector<1x36xf32> to vector<16x36xf32>
      %34 = arith.addf %31, %33 : vector<16x36xf32>
      %35 = vector.extract_strided_slice %34 {offsets = [0, 0], sizes = [16, 32], strides = [1, 1]} : vector<16x36xf32> to vector<16x32xf32>
      %36 = vector.shape_cast %35 : vector<16x32xf32> to vector<2x8x32xf32>
      %37 = vector.extract_strided_slice %34 {offsets = [0, 32], sizes = [16, 4], strides = [1, 1]} : vector<16x36xf32> to vector<16x4xf32>
      %38 = vector.shape_cast %37 : vector<16x4xf32> to vector<2x8x4xf32>
      %c0_31 = arith.constant 0 : index
      %c0_32 = arith.constant 0 : index
      %c0_33 = arith.constant 0 : index
      %39 = vector.load %arg4[%c0_31, %c0_32, %c0_33] : memref<2x1x8xf32, #tpu.memory_space<vmem>>, vector<2x1x8xf32>
      %cst_34 = arith.constant -1.000000e+30 : f32
      %40 = vector.broadcast %cst_34 : f32 to vector<2x1x8xf32>
      %41 = arith.mulf %39, %40 : vector<2x1x8xf32>
      %cst_35 = arith.constant 0.000000e+00 : f32
      %42 = vector.broadcast %cst_35 : f32 to vector<2x8x8xf32>
      %cst_36 = arith.constant 0.000000e+00 : f32
      %43 = vector.broadcast %cst_36 : f32 to vector<2x8x1xf32>
      %44 = vector.extract_strided_slice %28 {offsets = [0, 0, 0], sizes = [2, 8, 8], strides = [1, 1, 1]} : vector<2x8x32xf32> to vector<2x8x8xf32>
      %cst_37 = arith.constant 0.353553385 : f32
      %45 = vector.broadcast %cst_37 : f32 to vector<2x8x8xf32>
      %46 = arith.mulf %44, %45 : vector<2x8x8xf32>
      %47 = vector.extract_strided_slice %36 {offsets = [0, 0, 0], sizes = [2, 8, 8], strides = [1, 1, 1]} : vector<2x8x32xf32> to vector<2x8x8xf32>
      %cst_38 = arith.constant dense<0.000000e+00> : vector<2x8x8xf32>
      %48 = tpu.matmul %46, %47, %cst_38 {dimension_numbers = #tpu.dot_dimension_numbers<[2], [2], [1], [1], [0, 0, 0, 1, 1, 1], [0], [0]>} : vector<2x8x8xf32>, vector<2x8x8xf32>, vector<2x8x8xf32> -> vector<2x8x8xf32>
      %49 = vector.broadcast %41 : vector<2x1x8xf32> to vector<2x8x8xf32>
      %50 = arith.addf %48, %49 : vector<2x8x8xf32>
      %cst_39 = arith.constant dense<0xFF800000> : vector<2x8xf32>
      %51 = vector.multi_reduction <maximumf>, %50, %cst_39 [2] : vector<2x8x8xf32> to vector<2x8xf32>
      %52 = vector.shape_cast %51 : vector<2x8xf32> to vector<2x8x1xf32>
      %53 = vector.broadcast %52 : vector<2x8x1xf32> to vector<2x8x8xf32>
      %54 = arith.subf %50, %53 : vector<2x8x8xf32>
      %55 = math.exp %54 : vector<2x8x8xf32>
      %cst_40 = arith.constant dense<0.000000e+00> : vector<2x8xf32>
      %56 = vector.multi_reduction <add>, %55, %cst_40 [2] : vector<2x8x8xf32> to vector<2x8xf32>
      %57 = vector.shape_cast %56 : vector<2x8xf32> to vector<2x8x1xf32>
      %58 = tpu.reciprocal %57 {approx = true} : vector<2x8x1xf32> -> vector<2x8x1xf32>
      %59 = vector.broadcast %58 : vector<2x8x1xf32> to vector<2x8x8xf32>
      %60 = arith.mulf %55, %59 : vector<2x8x8xf32>
      %61 = arith.addf %42, %60 : vector<2x8x8xf32>
      %62 = vector.extract_strided_slice %38 {offsets = [0, 0, 0], sizes = [2, 8, 1], strides = [1, 1, 1]} : vector<2x8x4xf32> to vector<2x8x1xf32>
      %63 = vector.shape_cast %62 : vector<2x8x1xf32> to vector<2x8xf32>
      %64 = vector.shape_cast %63 : vector<2x8xf32> to vector<2x1x8xf32>
      %65 = vector.broadcast %64 : vector<2x1x8xf32> to vector<2x8x8xf32>
      %66 = arith.mulf %60, %65 : vector<2x8x8xf32>
      %cst_41 = arith.constant dense<0.000000e+00> : vector<2x8xf32>
      %67 = vector.multi_reduction <add>, %66, %cst_41 [2] : vector<2x8x8xf32> to vector<2x8xf32>
      %68 = vector.shape_cast %67 : vector<2x8xf32> to vector<2x8x1xf32>
      %69 = arith.addf %43, %68 : vector<2x8x1xf32>
      %70 = vector.extract_strided_slice %28 {offsets = [0, 0, 8], sizes = [2, 8, 8], strides = [1, 1, 1]} : vector<2x8x32xf32> to vector<2x8x8xf32>
      %cst_42 = arith.constant 0.353553385 : f32
      %71 = vector.broadcast %cst_42 : f32 to vector<2x8x8xf32>
      %72 = arith.mulf %70, %71 : vector<2x8x8xf32>
      %73 = vector.extract_strided_slice %36 {offsets = [0, 0, 8], sizes = [2, 8, 8], strides = [1, 1, 1]} : vector<2x8x32xf32> to vector<2x8x8xf32>
      %cst_43 = arith.constant dense<0.000000e+00> : vector<2x8x8xf32>
      %74 = tpu.matmul %72, %73, %cst_43 {dimension_numbers = #tpu.dot_dimension_numbers<[2], [2], [1], [1], [0, 0, 0, 1, 1, 1], [0], [0]>} : vector<2x8x8xf32>, vector<2x8x8xf32>, vector<2x8x8xf32> -> vector<2x8x8xf32>
      %75 = vector.broadcast %41 : vector<2x1x8xf32> to vector<2x8x8xf32>
      %76 = arith.addf %74, %75 : vector<2x8x8xf32>
      %cst_44 = arith.constant dense<0xFF800000> : vector<2x8xf32>
      %77 = vector.multi_reduction <maximumf>, %76, %cst_44 [2] : vector<2x8x8xf32> to vector<2x8xf32>
      %78 = vector.shape_cast %77 : vector<2x8xf32> to vector<2x8x1xf32>
      %79 = vector.broadcast %78 : vector<2x8x1xf32> to vector<2x8x8xf32>
      %80 = arith.subf %76, %79 : vector<2x8x8xf32>
      %81 = math.exp %80 : vector<2x8x8xf32>
      %cst_45 = arith.constant dense<0.000000e+00> : vector<2x8xf32>
      %82 = vector.multi_reduction <add>, %81, %cst_45 [2] : vector<2x8x8xf32> to vector<2x8xf32>
      %83 = vector.shape_cast %82 : vector<2x8xf32> to vector<2x8x1xf32>
      %84 = tpu.reciprocal %83 {approx = true} : vector<2x8x1xf32> -> vector<2x8x1xf32>
      %85 = vector.broadcast %84 : vector<2x8x1xf32> to vector<2x8x8xf32>
      %86 = arith.mulf %81, %85 : vector<2x8x8xf32>
      %87 = arith.addf %61, %86 : vector<2x8x8xf32>
      %88 = vector.extract_strided_slice %38 {offsets = [0, 0, 1], sizes = [2, 8, 1], strides = [1, 1, 1]} : vector<2x8x4xf32> to vector<2x8x1xf32>
      %89 = vector.shape_cast %88 : vector<2x8x1xf32> to vector<2x8xf32>
      %90 = vector.shape_cast %89 : vector<2x8xf32> to vector<2x1x8xf32>
      %91 = vector.broadcast %90 : vector<2x1x8xf32> to vector<2x8x8xf32>
      %92 = arith.mulf %86, %91 : vector<2x8x8xf32>
      %cst_46 = arith.constant dense<0.000000e+00> : vector<2x8xf32>
      %93 = vector.multi_reduction <add>, %92, %cst_46 [2] : vector<2x8x8xf32> to vector<2x8xf32>
      %94 = vector.shape_cast %93 : vector<2x8xf32> to vector<2x8x1xf32>
      %95 = arith.addf %69, %94 : vector<2x8x1xf32>
      %96 = vector.extract_strided_slice %28 {offsets = [0, 0, 16], sizes = [2, 8, 8], strides = [1, 1, 1]} : vector<2x8x32xf32> to vector<2x8x8xf32>
      %cst_47 = arith.constant 0.353553385 : f32
      %97 = vector.broadcast %cst_47 : f32 to vector<2x8x8xf32>
      %98 = arith.mulf %96, %97 : vector<2x8x8xf32>
      %99 = vector.extract_strided_slice %36 {offsets = [0, 0, 16], sizes = [2, 8, 8], strides = [1, 1, 1]} : vector<2x8x32xf32> to vector<2x8x8xf32>
      %cst_48 = arith.constant dense<0.000000e+00> : vector<2x8x8xf32>
      %100 = tpu.matmul %98, %99, %cst_48 {dimension_numbers = #tpu.dot_dimension_numbers<[2], [2], [1], [1], [0, 0, 0, 1, 1, 1], [0], [0]>} : vector<2x8x8xf32>, vector<2x8x8xf32>, vector<2x8x8xf32> -> vector<2x8x8xf32>
      %101 = vector.broadcast %41 : vector<2x1x8xf32> to vector<2x8x8xf32>
      %102 = arith.addf %100, %101 : vector<2x8x8xf32>
      %cst_49 = arith.constant dense<0xFF800000> : vector<2x8xf32>
      %103 = vector.multi_reduction <maximumf>, %102, %cst_49 [2] : vector<2x8x8xf32> to vector<2x8xf32>
      %104 = vector.shape_cast %103 : vector<2x8xf32> to vector<2x8x1xf32>
      %105 = vector.broadcast %104 : vector<2x8x1xf32> to vector<2x8x8xf32>
      %106 = arith.subf %102, %105 : vector<2x8x8xf32>
      %107 = math.exp %106 : vector<2x8x8xf32>
      %cst_50 = arith.constant dense<0.000000e+00> : vector<2x8xf32>
      %108 = vector.multi_reduction <add>, %107, %cst_50 [2] : vector<2x8x8xf32> to vector<2x8xf32>
      %109 = vector.shape_cast %108 : vector<2x8xf32> to vector<2x8x1xf32>
      %110 = tpu.reciprocal %109 {approx = true} : vector<2x8x1xf32> -> vector<2x8x1xf32>
      %111 = vector.broadcast %110 : vector<2x8x1xf32> to vector<2x8x8xf32>
      %112 = arith.mulf %107, %111 : vector<2x8x8xf32>
      %113 = arith.addf %87, %112 : vector<2x8x8xf32>
      %114 = vector.extract_strided_slice %38 {offsets = [0, 0, 2], sizes = [2, 8, 1], strides = [1, 1, 1]} : vector<2x8x4xf32> to vector<2x8x1xf32>
      %115 = vector.shape_cast %114 : vector<2x8x1xf32> to vector<2x8xf32>
      %116 = vector.shape_cast %115 : vector<2x8xf32> to vector<2x1x8xf32>
      %117 = vector.broadcast %116 : vector<2x1x8xf32> to vector<2x8x8xf32>
      %118 = arith.mulf %112, %117 : vector<2x8x8xf32>
      %cst_51 = arith.constant dense<0.000000e+00> : vector<2x8xf32>
      %119 = vector.multi_reduction <add>, %118, %cst_51 [2] : vector<2x8x8xf32> to vector<2x8xf32>
      %120 = vector.shape_cast %119 : vector<2x8xf32> to vector<2x8x1xf32>
      %121 = arith.addf %95, %120 : vector<2x8x1xf32>
      %122 = vector.extract_strided_slice %28 {offsets = [0, 0, 24], sizes = [2, 8, 8], strides = [1, 1, 1]} : vector<2x8x32xf32> to vector<2x8x8xf32>
      %cst_52 = arith.constant 0.353553385 : f32
      %123 = vector.broadcast %cst_52 : f32 to vector<2x8x8xf32>
      %124 = arith.mulf %122, %123 : vector<2x8x8xf32>
      %125 = vector.extract_strided_slice %36 {offsets = [0, 0, 24], sizes = [2, 8, 8], strides = [1, 1, 1]} : vector<2x8x32xf32> to vector<2x8x8xf32>
      %cst_53 = arith.constant dense<0.000000e+00> : vector<2x8x8xf32>
      %126 = tpu.matmul %124, %125, %cst_53 {dimension_numbers = #tpu.dot_dimension_numbers<[2], [2], [1], [1], [0, 0, 0, 1, 1, 1], [0], [0]>} : vector<2x8x8xf32>, vector<2x8x8xf32>, vector<2x8x8xf32> -> vector<2x8x8xf32>
      %127 = vector.broadcast %41 : vector<2x1x8xf32> to vector<2x8x8xf32>
      %128 = arith.addf %126, %127 : vector<2x8x8xf32>
      %cst_54 = arith.constant dense<0xFF800000> : vector<2x8xf32>
      %129 = vector.multi_reduction <maximumf>, %128, %cst_54 [2] : vector<2x8x8xf32> to vector<2x8xf32>
      %130 = vector.shape_cast %129 : vector<2x8xf32> to vector<2x8x1xf32>
      %131 = vector.broadcast %130 : vector<2x8x1xf32> to vector<2x8x8xf32>
      %132 = arith.subf %128, %131 : vector<2x8x8xf32>
      %133 = math.exp %132 : vector<2x8x8xf32>
      %cst_55 = arith.constant dense<0.000000e+00> : vector<2x8xf32>
      %134 = vector.multi_reduction <add>, %133, %cst_55 [2] : vector<2x8x8xf32> to vector<2x8xf32>
      %135 = vector.shape_cast %134 : vector<2x8xf32> to vector<2x8x1xf32>
      %136 = tpu.reciprocal %135 {approx = true} : vector<2x8x1xf32> -> vector<2x8x1xf32>
      %137 = vector.broadcast %136 : vector<2x8x1xf32> to vector<2x8x8xf32>
      %138 = arith.mulf %133, %137 : vector<2x8x8xf32>
      %139 = arith.addf %113, %138 : vector<2x8x8xf32>
      %140 = vector.extract_strided_slice %38 {offsets = [0, 0, 3], sizes = [2, 8, 1], strides = [1, 1, 1]} : vector<2x8x4xf32> to vector<2x8x1xf32>
      %141 = vector.shape_cast %140 : vector<2x8x1xf32> to vector<2x8xf32>
      %142 = vector.shape_cast %141 : vector<2x8xf32> to vector<2x1x8xf32>
      %143 = vector.broadcast %142 : vector<2x1x8xf32> to vector<2x8x8xf32>
      %144 = arith.mulf %138, %143 : vector<2x8x8xf32>
      %cst_56 = arith.constant dense<0.000000e+00> : vector<2x8xf32>
      %145 = vector.multi_reduction <add>, %144, %cst_56 [2] : vector<2x8x8xf32> to vector<2x8xf32>
      %146 = vector.shape_cast %145 : vector<2x8xf32> to vector<2x8x1xf32>
      %147 = arith.addf %121, %146 : vector<2x8x1xf32>
      %c0_57 = arith.constant 0 : index
      %c0_58 = arith.constant 0 : index
      %148 = vector.load %arg11[%c0_57, %c0_58] : memref<1x1xf32, #tpu.memory_space<vmem>>, vector<1x1xf32>
      %149 = vector.shape_cast %148 : vector<1x1xf32> to vector<1x1x1xf32>
      %150 = vector.broadcast %149 : vector<1x1x1xf32> to vector<2x8x1xf32>
      %151 = arith.addf %147, %150 : vector<2x8x1xf32>
      %152 = arith.negf %151 : vector<2x8x1xf32>
      %153 = math.exp %152 : vector<2x8x1xf32>
      %cst_59 = arith.constant 1.000000e+00 : f32
      %154 = vector.broadcast %cst_59 : f32 to vector<2x8x1xf32>
      %155 = arith.addf %154, %153 : vector<2x8x1xf32>
      %156 = arith.divf %154, %155 : vector<2x8x1xf32>
      %c0_60 = arith.constant 0 : index
      %c0_61 = arith.constant 0 : index
      %c0_62 = arith.constant 0 : index
      %157 = vector.load %arg13[%c0_60, %c0_61, %c0_62] : memref<2x8x1xf32, #tpu.memory_space<vmem>>, vector<2x8x1xf32>
      tpu.vector_store %arg13[%c0_60, %c0_61, %c0_62], %156 {strides = array<i32>} : memref<2x8x1xf32, #tpu.memory_space<vmem>>, vector<2x8x1xf32>,
      %cst_63 = arith.constant 1.000000e+00 : f32
      %158 = vector.broadcast %cst_63 : f32 to vector<2x8x1xf32>
      %159 = arith.subf %158, %156 : vector<2x8x1xf32>
      %cst_64 = arith.constant 2.500000e-01 : f32
      %160 = vector.broadcast %cst_64 : f32 to vector<2x8x1xf32>
      %161 = arith.mulf %159, %160 : vector<2x8x1xf32>
      %162 = vector.broadcast %161 : vector<2x8x1xf32> to vector<2x8x8xf32>
      %163 = arith.mulf %162, %139 : vector<2x8x8xf32>
      %c0_65 = arith.constant 0 : index
      %c0_66 = arith.constant 0 : index
      %c0_67 = arith.constant 0 : index
      %164 = vector.load %arg14[%c0_65, %c0_66, %c0_67] : memref<2x8x8xf32, #tpu.memory_space<vmem>>, vector<2x8x8xf32>
      tpu.vector_store %arg14[%c0_65, %c0_66, %c0_67], %163 {strides = array<i32>} : memref<2x8x8xf32, #tpu.memory_space<vmem>>, vector<2x8x8xf32>,
    } else {
    }
    %c0 = arith.constant 0 : index
    %c0_1 = arith.constant 0 : index
    %c0_2 = arith.constant 0 : index
    %3 = vector.load %arg13[%c0, %c0_1, %c0_2] : memref<2x8x1xf32, #tpu.memory_space<vmem>>, vector<2x8x1xf32>
    %c0_3 = arith.constant 0 : index
    %c0_4 = arith.constant 0 : index
    %c0_5 = arith.constant 0 : index
    %4 = vector.load %arg14[%c0_3, %c0_4, %c0_5] : memref<2x8x8xf32, #tpu.memory_space<vmem>>, vector<2x8x8xf32>
    %c0_6 = arith.constant 0 : index
    %c0_7 = arith.constant 0 : index
    %c0_8 = arith.constant 0 : index
    %5 = vector.load %arg5[%c0_6, %c0_7, %c0_8] : memref<2x8x1xi32, #tpu.memory_space<vmem>>, vector<2x8x1xi32>
    %6 = tpu.iota {dimensions = array<i32: 2>} : vector<2x8x128xi32>
    %c128_i32 = arith.constant 128 : i32
    %7 = arith.muli %arg1, %c128_i32 : i32
    %8 = vector.broadcast %7 : i32 to vector<2x8x128xi32>
    %9 = arith.addi %6, %8 : vector<2x8x128xi32>
    %10 = vector.broadcast %5 : vector<2x8x1xi32> to vector<2x8x128xi32>
    %11 = arith.cmpi eq, %9, %10 : vector<2x8x128xi32>
    %12 = arith.extui %11 : vector<2x8x128xi1> to vector<2x8x128xi32>
    %13 = arith.sitofp %12 : vector<2x8x128xi32> to vector<2x8x128xf32>
    %cst = arith.constant dense<0.000000e+00> : vector<2x8x128xf32>
    %14 = tpu.matmul %4, %13, %cst {dimension_numbers = #tpu.dot_dimension_numbers<[2], [1], [1], [2], [0, 0, 0, 1, 1, 2], [0], [0]>} : vector<2x8x8xf32>, vector<2x8x128xf32>, vector<2x8x128xf32> -> vector<2x8x128xf32>
    %c0_9 = arith.constant 0 : index
    %c0_10 = arith.constant 0 : index
    %c0_11 = arith.constant 0 : index
    %15 = vector.load %arg6[%c0_9, %c0_10, %c0_11] : memref<2x8x128xf32, #tpu.memory_space<vmem>>, vector<2x8x128xf32>
    %16 = vector.broadcast %3 : vector<2x8x1xf32> to vector<2x8x128xf32>
    %17 = arith.mulf %16, %15 : vector<2x8x128xf32>
    %18 = arith.addf %17, %14 : vector<2x8x128xf32>
    %c0_12 = arith.constant 0 : index
    %c0_13 = arith.constant 0 : index
    %c0_14 = arith.constant 0 : index
    %19 = vector.load %arg12[%c0_12, %c0_13, %c0_14] : memref<2x8x128xf32, #tpu.memory_space<vmem>>, vector<2x8x128xf32>
    tpu.vector_store %arg12[%c0_12, %c0_13, %c0_14], %18 {strides = array<i32>} : memref<2x8x128xf32, #tpu.memory_space<vmem>>, vector<2x8x128xf32>,
    return
  }
  func.func @transform_0(%arg0: i32, %arg1: i32) -> (i32, i32, i32) {
    %c0_i32 = arith.constant 0 : i32
    %c0_i32_0 = arith.constant 0 : i32
    %c0_i32_1 = arith.constant 0 : i32
    return %arg0, %c0_i32, %c0_i32_0 : i32, i32, i32
  }
  func.func @transform_1(%arg0: i32, %arg1: i32) -> (i32, i32, i32) {
    %c0_i32 = arith.constant 0 : i32
    %c0_i32_0 = arith.constant 0 : i32
    %c0_i32_1 = arith.constant 0 : i32
    return %arg0, %c0_i32, %c0_i32_0 : i32, i32, i32
  }
  func.func @transform_2(%arg0: i32, %arg1: i32) -> (i32, i32, i32) {
    %c0_i32 = arith.constant 0 : i32
    %c0_i32_0 = arith.constant 0 : i32
    %c0_i32_1 = arith.constant 0 : i32
    return %arg0, %c0_i32, %c0_i32_0 : i32, i32, i32
  }
  func.func @transform_3(%arg0: i32, %arg1: i32) -> (i32, i32, i32) {
    %c0_i32 = arith.constant 0 : i32
    %c0_i32_0 = arith.constant 0 : i32
    %c0_i32_1 = arith.constant 0 : i32
    return %arg0, %c0_i32, %c0_i32_0 : i32, i32, i32
  }
  func.func @transform_4(%arg0: i32, %arg1: i32) -> (i32, i32, i32) {
    %c0_i32 = arith.constant 0 : i32
    %c0_i32_0 = arith.constant 0 : i32
    return %arg0, %c0_i32, %arg1 : i32, i32, i32
  }
  func.func @transform_5(%arg0: i32, %arg1: i32) -> (i32, i32) {
    %c0_i32 = arith.constant 0 : i32
    %c0_i32_0 = arith.constant 0 : i32
    %c0_i32_1 = arith.constant 0 : i32
    return %c0_i32, %c0_i32_0 : i32, i32
  }
  func.func @transform_6(%arg0: i32, %arg1: i32) -> (i32, i32) {
    %c0_i32 = arith.constant 0 : i32
    %c0_i32_0 = arith.constant 0 : i32
    %c0_i32_1 = arith.constant 0 : i32
    return %c0_i32, %c0_i32_0 : i32, i32
  }
  func.func @transform_7(%arg0: i32, %arg1: i32) -> (i32, i32) {
    %c0_i32 = arith.constant 0 : i32
    %c0_i32_0 = arith.constant 0 : i32
    %c0_i32_1 = arith.constant 0 : i32
    return %c0_i32, %c0_i32_0 : i32, i32
  }
  func.func @transform_8(%arg0: i32, %arg1: i32) -> (i32, i32) {
    %c0_i32 = arith.constant 0 : i32
    %c0_i32_0 = arith.constant 0 : i32
    %c0_i32_1 = arith.constant 0 : i32
    return %c0_i32, %c0_i32_0 : i32, i32
  }
  func.func @transform_9(%arg0: i32, %arg1: i32) -> (i32, i32) {
    %c0_i32 = arith.constant 0 : i32
    %c0_i32_0 = arith.constant 0 : i32
    %c0_i32_1 = arith.constant 0 : i32
    return %c0_i32, %c0_i32_0 : i32, i32
  }
  func.func @transform_10(%arg0: i32, %arg1: i32) -> (i32, i32, i32) {
    %c0_i32 = arith.constant 0 : i32
    %c0_i32_0 = arith.constant 0 : i32
    return %arg0, %c0_i32, %arg1 : i32, i32, i32
  }
}

</mosaic_0001>

<llo_original>
// kernel: tpu_custom_call.1
$region0: #{tpu_custom_call.1}
  #allocation0 [shape = 'u32[]', space=smem, size = 0x4, offset = 0x4, fixed_abs, tag = 'smem constant byte address 0x4 - core index']
  #allocation1 [shape = 'u32[144,128]{1,0:T(1,128)}', space=vmem, size = 0x12000, scoped, tag = 'internal scratch']
  #allocation2 [shape = 'f32[2,8,1]{2,1,0:T(8,128)}', space=vmem, size = 0x2000, scoped, tag = 'scratch operand']
  #allocation3 [shape = 'f32[2,8,8]{2,1,0:T(8,128)}', space=vmem, size = 0x2000, scoped, tag = 'scratch operand']
  #allocation4 [shape = 'f32[1,1]{1,0:T(1,128)S(1)}', space=vmem, size = 0x200, scoped, tag = 'scoped memory for tpu_custom_call.1']
  %s0 = inlined_call_operand.hbm [shape: f32[2,8,32], index: 0, kind: input, shape index: {}]
  %s1 = inlined_call_operand.hbm [shape: f32[2,8,32], index: 1, kind: input, shape index: {}]
  %s2 = inlined_call_operand.vmem [shape: f32[2,1,8], index: 2, kind: input, shape index: {}]
  %s3 = inlined_call_operand.vmem [shape: s32[2,8,1], index: 3, kind: input, shape index: {}]
  %s4 = inlined_call_operand.hbm [shape: f32[2,8,128], index: 4, kind: input, shape index: {}]
  %s5 = inlined_call_operand.vmem [shape: f32[32,32], index: 5, kind: input, shape index: {}]
  %s6 = inlined_call_operand.vmem [shape: f32[1,32], index: 6, kind: input, shape index: {}]
  %s7 = inlined_call_operand.hbm [shape: f32[32,36], index: 7, kind: input, shape index: {}]
  %s8 = inlined_call_operand.vmem [shape: f32[1,36], index: 8, kind: input, shape index: {}]
  %s9 = inlined_call_operand.<no memory space> [shape: f32[1,1], index: 9, kind: input, shape index: {}]
  %s10 = inlined_call_operand.hbm [shape: f32[2,8,128], index: 10, kind: output, shape index: {}]
  %s11 = sld [smem:[#allocation0]]
  $region70: #{tpu_custom_call.1} parent=0
    _
  %s13 = ssub.s32 1, %s11
  %s14 = scalar_select 0, %s13, %s11
  %v15 = vstv %s9
  %16 = vst [vmem:[#allocation4] sm:$0x1] %v15
  $region1: #{tpu_custom_call.1} parent=0
    #allocation5 [shape = 'u8[8192]{0}', space=vmem, size = 0x2000, scoped, tag = 'input window, operand 0, single buffered']
    #allocation6 [shape = 's32[1]{0}', space=sflag, size = 0x4, scoped, tag = 'scoped memory for tpu_custom_call.1']
    #allocation7 [shape = 's32[1]{0}', space=sflag, size = 0x4, scoped, tag = 'scoped memory for tpu_custom_call.1']
    #allocation8 [shape = 'u8[8192]{0}', space=vmem, size = 0x2000, scoped, tag = 'input window, operand 1, single buffered']
    #allocation9 [shape = 's32[1]{0}', space=sflag, size = 0x4, scoped, tag = 'scoped memory for tpu_custom_call.1']
    #allocation10 [shape = 'u8[8192]{0}', space=vmem, size = 0x2000, scoped, tag = 'input window, operand 4, single buffered']
    #allocation11 [shape = 'u8[16384]{0}', space=vmem, size = 0x4000, scoped, tag = 'input window, operand 7, single buffered']
    #allocation12 [shape = 's32[1]{0}', space=sflag, size = 0x4, scoped, tag = 'scoped memory for tpu_custom_call.1']
    #allocation13 [shape = 'u8[8192]{0}', space=vmem, size = 0x2000, scoped, tag = 'output window, operand 0, single buffered']
    %17 = vsyncpa [#allocation6], 0
    %18 = vsyncpa [#allocation9], 0
    %19 = vsyncpa [#allocation12], 0
    %20 = vsyncpa [#allocation7], 0
    // Predicated region
    $region2: #{tpu_custom_call.1} parent=1 // pred_check
      _
    $region3: #{tpu_custom_call.1} parent=1 // pred_check_branch
      %22 = sbr.rel (0) target = $region5
    $region4: #{tpu_custom_call.1} parent=1 // pred_region
      %s24 = ssub.s32 256, 256
      %25 = vsyncadd [#allocation6], %s24
      %s26 = sshll.u32 [#allocation5], 4
      %s27 = int_to_ptr.vmem [resolvable:$true] %s26
      %32 = dma.hbm_to_vmem [thread:$0]  %s0, 256, %s27, [#allocation6], 128, 128, 8
    $region5: #{tpu_custom_call.1} parent=1 // pred_fallthru
      _
    // Predicated region
    $region6: #{tpu_custom_call.1} parent=1 // pred_check
      _
    $region7: #{tpu_custom_call.1} parent=1 // pred_check_branch
      %34 = sbr.rel (0) target = $region9
    $region8: #{tpu_custom_call.1} parent=1 // pred_region
      %s36 = ssub.s32 256, 256
      %37 = vsyncadd [#allocation9], %s36
      %s38 = sshll.u32 [#allocation8], 4
      %s39 = int_to_ptr.vmem [resolvable:$true] %s38
      %44 = dma.hbm_to_vmem [thread:$0]  %s1, 256, %s39, [#allocation9], 128, 128, 8
    $region9: #{tpu_custom_call.1} parent=1 // pred_fallthru
      _
    // Predicated region
    $region10: #{tpu_custom_call.1} parent=1 // pred_check
      _
    $region11: #{tpu_custom_call.1} parent=1 // pred_check_branch
      %46 = sbr.rel (0) target = $region13
    $region12: #{tpu_custom_call.1} parent=1 // pred_region
      _
    $region13: #{tpu_custom_call.1} parent=1 // pred_fallthru
      _
    // Predicated region
    $region14: #{tpu_custom_call.1} parent=1 // pred_check
      _
    $region15: #{tpu_custom_call.1} parent=1 // pred_check_branch
      %48 = sbr.rel (0) target = $region17
    $region16: #{tpu_custom_call.1} parent=1 // pred_region
      _
    $region17: #{tpu_custom_call.1} parent=1 // pred_fallthru
      _
    // Predicated region
    $region18: #{tpu_custom_call.1} parent=1 // pred_check
      _
    $region19: #{tpu_custom_call.1} parent=1 // pred_check_branch
      %50 = sbr.rel (0) target = $region21
    $region20: #{tpu_custom_call.1} parent=1 // pred_region
      %s52 = ssub.s32 256, 256
      %53 = vsyncadd [#allocation9], %s52
      %s54 = sshll.u32 [#allocation10], 4
      %s55 = int_to_ptr.vmem [resolvable:$true] %s54
      %60 = dma.hbm_to_vmem [thread:$0]  %s4, 256, %s55, [#allocation9], 128, 128, 8
    $region21: #{tpu_custom_call.1} parent=1 // pred_fallthru
      _
    // Predicated region
    $region22: #{tpu_custom_call.1} parent=1 // pred_check
      _
    $region23: #{tpu_custom_call.1} parent=1 // pred_check_branch
      %62 = sbr.rel (0) target = $region25
    $region24: #{tpu_custom_call.1} parent=1 // pred_region
      _
    $region25: #{tpu_custom_call.1} parent=1 // pred_fallthru
      _
    // Predicated region
    $region26: #{tpu_custom_call.1} parent=1 // pred_check
      _
    $region27: #{tpu_custom_call.1} parent=1 // pred_check_branch
      %64 = sbr.rel (0) target = $region29
    $region28: #{tpu_custom_call.1} parent=1 // pred_region
      _
    $region29: #{tpu_custom_call.1} parent=1 // pred_fallthru
      _
    // Predicated region
    $region30: #{tpu_custom_call.1} parent=1 // pred_check
      _
    $region31: #{tpu_custom_call.1} parent=1 // pred_check_branch
      %66 = sbr.rel (0) target = $region33
    $region32: #{tpu_custom_call.1} parent=1 // pred_region
      %s68 = ssub.s32 512, 512
      %69 = vsyncadd [#allocation12], %s68
      %s70 = sshll.u32 [#allocation11], 4
      %s71 = int_to_ptr.vmem [resolvable:$true] %s70
      %76 = dma.hbm_to_vmem [thread:$0]  %s7, 512, %s71, [#allocation12], 128, 128, 8
    $region33: #{tpu_custom_call.1} parent=1 // pred_fallthru
      _
    // Predicated region
    $region34: #{tpu_custom_call.1} parent=1 // pred_check
      _
    $region35: #{tpu_custom_call.1} parent=1 // pred_check_branch
      %78 = sbr.rel (0) target = $region37
    $region36: #{tpu_custom_call.1} parent=1 // pred_region
      _
    $region37: #{tpu_custom_call.1} parent=1 // pred_fallthru
      _
    // Predicated region
    $region38: #{tpu_custom_call.1} parent=1 // pred_check
      _
    $region39: #{tpu_custom_call.1} parent=1 // pred_check_branch
      %80 = sbr.rel (0) target = $region41
    $region40: #{tpu_custom_call.1} parent=1 // pred_region
      _
    $region41: #{tpu_custom_call.1} parent=1 // pred_fallthru
      _
    // Predicated region
    $region42: #{tpu_custom_call.1} parent=1 // pred_check
      _
    $region43: #{tpu_custom_call.1} parent=1 // pred_check_branch
      %82 = sbr.rel (0) target = $region45
    $region44: #{tpu_custom_call.1} parent=1 // pred_region
      %83 = dma.done [#allocation6], 256
    $region45: #{tpu_custom_call.1} parent=1 // pred_fallthru
      _
    // Predicated region
    $region46: #{tpu_custom_call.1} parent=1 // pred_check
      _
    $region47: #{tpu_custom_call.1} parent=1 // pred_check_branch
      %85 = sbr.rel (0) target = $region49
    $region48: #{tpu_custom_call.1} parent=1 // pred_region
      %86 = dma.done [#allocation9], 256
    $region49: #{tpu_custom_call.1} parent=1 // pred_fallthru
      _
    // Predicated region
    $region50: #{tpu_custom_call.1} parent=1 // pred_check
      _
    $region51: #{tpu_custom_call.1} parent=1 // pred_check_branch
      %88 = sbr.rel (0) target = $region53
    $region52: #{tpu_custom_call.1} parent=1 // pred_region
      %89 = dma.done [#allocation9], 256
    $region53: #{tpu_custom_call.1} parent=1 // pred_fallthru
      _
    // Predicated region
    $region54: #{tpu_custom_call.1} parent=1 // pred_check
      _
    $region55: #{tpu_custom_call.1} parent=1 // pred_check_branch
      %91 = sbr.rel (0) target = $region57
    $region56: #{tpu_custom_call.1} parent=1 // pred_region
      %92 = dma.done [#allocation12], 512
    $region57: #{tpu_custom_call.1} parent=1 // pred_fallthru
      _
    %p93 = scmp.eq.s32.totalorder 0, 0
    // Predicated region
    $region58: #{tpu_custom_call.1} parent=1 // pred_check
      %p94 = pneg %p93
    $region59: #{tpu_custom_call.1} parent=1 // pred_check_branch
      %96 = sbr.rel (%p94) target = $region61
    $region60: #{tpu_custom_call.1} parent=1 // pred_region
      %v97 = vld [vmem:[#allocation5] sm:$0xff]
      %v98 = vld [vmem:[#allocation5 + $0x8] sm:$0xff]
      %v99 = vld [vmem:[#allocation8] sm:$0xff]
      %v100 = vld [vmem:[#allocation8 + $0x8] sm:$0xff]
      %v101 = vld [vmem:[%s5] sm:$0xff]
      %v102 = vld [vmem:[%s5 + $0x8] sm:$0xff]
      %v103 = vld [vmem:[%s5 + $0x10] sm:$0xff]
      %v104 = vld [vmem:[%s5 + $0x18] sm:$0xff]
      %v105 = vld [vmem:[%s6] sm:$0x1]
      %v107 = vlaneseq
      %v108 = vshrl.u32 %v107, 7
      %v109 = vsub.s32 0, %v108
      %v110 = vrot.slane %v105, %v109
      %vm112 = vcmask 261120
      %v114 = vsel %vm112, %v97, 0
      %v117 = vsel %vm112, %v98, 0
      %119 = vmatprep.subr.mxu0 0.0
      %120 = vmatpush1.msra.mxu0 %v101
      %121 = vmatprep.subr.mxu0 0.0
      %122 = vmatpush1.msra.mxu0 %v102
      %123 = vmatprep.subr.mxu0 0.0
      %124 = vmatpush1.msra.mxu0 %v103
      %125 = vmatprep.subr.mxu0 0.0
      %126 = vmatpush1.msra.mxu0 %v104
      %127 = vmatprep.subr.mxu0 0.0
      %128 = vmatpush1.msra.mxu0 0.0
      %129 = vmatprep.subr.mxu0 0.0
      %130 = vmatpush1.msra.mxu0 0.0
      %131 = vmatprep.subr.mxu0 0.0
      %132 = vmatpush1.msra.mxu0 0.0
      %133 = vmatprep.subr.mxu0 0.0
      %134 = vmatpush1.msra.mxu0 0.0
      %135 = vmatprep.subr.mxu0 0.0
      %136 = vmatpush1.msra.mxu0 0.0
      %137 = vmatprep.subr.mxu0 0.0
      %138 = vmatpush1.msra.mxu0 0.0
      %139 = vmatprep.subr.mxu0 0.0
      %140 = vmatpush1.msra.mxu0 0.0
      %141 = vmatprep.subr.mxu0 0.0
      %142 = vmatpush1.msra.mxu0 0.0
      %143 = vmatprep.subr.mxu0 0.0
      %144 = vmatpush1.msra.mxu0 0.0
      %145 = vmatprep.subr.mxu0 0.0
      %146 = vmatpush1.msra.mxu0 0.0
      %147 = vmatprep.subr.mxu0 0.0
      %148 = vmatpush1.msra.mxu0 0.0
      %149 = vmatprep.subr.mxu0 0.0
      %150 = vmatpush1.msra.mxu0 0.0
      %151 = vmatprep.subr.mxu0 0.0
      %152 = vmatpush1.msra.mxu0 0.0
      %153 = vmatprep.subr.mxu0 0.0
      %154 = vmatpush1.msra.mxu0 0.0
      %155 = vmatprep.subr.mxu0 0.0
      %156 = vmatpush1.msra.mxu0 0.0
      %157 = vmatprep.subr.mxu0 0.0
      %158 = vmatpush1.msra.mxu0 0.0
      %159 = vmatprep.subr.mxu0 0.0
      %160 = vmatpush1.msra.mxu0 0.0
      %161 = vmatprep.subr.mxu0 0.0
      %162 = vmatpush1.msra.mxu0 0.0
      %163 = vmatprep.subr.mxu0 0.0
      %164 = vmatpush1.msra.mxu0 0.0
      %165 = vmatprep.subr.mxu0 0.0
      %166 = vmatpush1.msra.mxu0 0.0
      %167 = vmatprep.subr.mxu0 0.0
      %168 = vmatpush1.msra.mxu0 0.0
      %169 = vmatprep.subr.mxu0 0.0
      %170 = vmatpush1.msra.mxu0 0.0
      %171 = vmatprep.subr.mxu0 0.0
      %172 = vmatpush1.msra.mxu0 0.0
      %173 = vmatprep.subr.mxu0 0.0
      %174 = vmatpush1.msra.mxu0 0.0
      %175 = vmatprep.subr.mxu0 0.0
      %176 = vmatpush1.msra.mxu0 0.0
      %177 = vmatprep.subr.mxu0 0.0
      %178 = vmatpush1.msra.mxu0 0.0
      %179 = vmatprep.subr.mxu0 0.0
      %180 = vmatpush1.msra.mxu0 0.0
      %181 = vmatprep.subr.mxu0 0.0
      %182 = vmatpush1.msra.mxu0 0.0
      %183 = vmatprep.mubr.f32.mxu0 0.0
      %184 = vmatmul.mubr.f32.gmra.mrb[0].mxu0 %v114
      %v185 = vpop.f32.mrb[0].mxu0
      %v186 = vadd.f32 %v110, %v185
      %v187 = vpop.f32.mrb[0].mxu0
      %188 = vmatprep.mubr.f32.mxu0 0.0
      %189 = vmatmul.mubr.f32.gmra.mrb[0].mxu0 %v117
      %v190 = vpop.f32.mrb[0].mxu0
      %v191 = vadd.f32 %v110, %v190
      %v192 = vpop.f32.mrb[0].mxu0
      %193 = vdwg.mxu0
      %v194 = vld [vmem:[#allocation11] sm:$0xff]
      %v195 = vld [vmem:[#allocation11 + $0x8] sm:$0xff]
      %v196 = vld [vmem:[#allocation11 + $0x10] sm:$0xff]
      %v197 = vld [vmem:[#allocation11 + $0x18] sm:$0xff]
      %v198 = vld [vmem:[%s8] sm:$0x1]
      %v200 = vlaneseq
      %v201 = vshrl.u32 %v200, 7
      %v202 = vsub.s32 0, %v201
      %v203 = vrot.slane %v198, %v202
      %v206 = vsel %vm112, %v99, 0
      %v209 = vsel %vm112, %v100, 0
      %211 = vmatprep.subr.mxu0 0.0
      %212 = vmatpush1.msra.mxu0 %v194
      %213 = vmatprep.subr.mxu0 0.0
      %214 = vmatpush1.msra.mxu0 %v195
      %215 = vmatprep.subr.mxu0 0.0
      %216 = vmatpush1.msra.mxu0 %v196
      %217 = vmatprep.subr.mxu0 0.0
      %218 = vmatpush1.msra.mxu0 %v197
      %219 = vmatprep.subr.mxu0 0.0
      %220 = vmatpush1.msra.mxu0 0.0
      %221 = vmatprep.subr.mxu0 0.0
      %222 = vmatpush1.msra.mxu0 0.0
      %223 = vmatprep.subr.mxu0 0.0
      %224 = vmatpush1.msra.mxu0 0.0
      %225 = vmatprep.subr.mxu0 0.0
      %226 = vmatpush1.msra.mxu0 0.0
      %227 = vmatprep.subr.mxu0 0.0
      %228 = vmatpush1.msra.mxu0 0.0
      %229 = vmatprep.subr.mxu0 0.0
      %230 = vmatpush1.msra.mxu0 0.0
      %231 = vmatprep.subr.mxu0 0.0
      %232 = vmatpush1.msra.mxu0 0.0
      %233 = vmatprep.subr.mxu0 0.0
      %234 = vmatpush1.msra.mxu0 0.0
      %235 = vmatprep.subr.mxu0 0.0
      %236 = vmatpush1.msra.mxu0 0.0
      %237 = vmatprep.subr.mxu0 0.0
      %238 = vmatpush1.msra.mxu0 0.0
      %239 = vmatprep.subr.mxu0 0.0
      %240 = vmatpush1.msra.mxu0 0.0
      %241 = vmatprep.subr.mxu0 0.0
      %242 = vmatpush1.msra.mxu0 0.0
      %243 = vmatprep.subr.mxu0 0.0
      %244 = vmatpush1.msra.mxu0 0.0
      %245 = vmatprep.subr.mxu0 0.0
      %246 = vmatpush1.msra.mxu0 0.0
      %247 = vmatprep.subr.mxu0 0.0
      %248 = vmatpush1.msra.mxu0 0.0
      %249 = vmatprep.subr.mxu0 0.0
      %250 = vmatpush1.msra.mxu0 0.0
      %251 = vmatprep.subr.mxu0 0.0
      %252 = vmatpush1.msra.mxu0 0.0
      %253 = vmatprep.subr.mxu0 0.0
      %254 = vmatpush1.msra.mxu0 0.0
      %255 = vmatprep.subr.mxu0 0.0
      %256 = vmatpush1.msra.mxu0 0.0
      %257 = vmatprep.subr.mxu0 0.0
      %258 = vmatpush1.msra.mxu0 0.0
      %259 = vmatprep.subr.mxu0 0.0
      %260 = vmatpush1.msra.mxu0 0.0
      %261 = vmatprep.subr.mxu0 0.0
      %262 = vmatpush1.msra.mxu0 0.0
      %263 = vmatprep.subr.mxu0 0.0
      %264 = vmatpush1.msra.mxu0 0.0
      %265 = vmatprep.subr.mxu0 0.0
      %266 = vmatpush1.msra.mxu0 0.0
      %267 = vmatprep.subr.mxu0 0.0
      %268 = vmatpush1.msra.mxu0 0.0
      %269 = vmatprep.subr.mxu0 0.0
      %270 = vmatpush1.msra.mxu0 0.0
      %271 = vmatprep.subr.mxu0 0.0
      %272 = vmatpush1.msra.mxu0 0.0
      %273 = vmatprep.subr.mxu0 0.0
      %274 = vmatpush1.msra.mxu0 0.0
      %275 = vmatprep.mubr.f32.mxu0 0.0
      %276 = vmatmul.mubr.f32.gmra.mrb[0].mxu0 %v206
      %v277 = vpop.f32.mrb[0].mxu0
      %v278 = vadd.f32 %v203, %v277
      %v279 = vpop.f32.mrb[0].mxu0
      %280 = vmatprep.mubr.f32.mxu0 0.0
      %281 = vmatmul.mubr.f32.gmra.mrb[0].mxu0 %v209
      %v282 = vpop.f32.mrb[0].mxu0
      %v283 = vadd.f32 %v203, %v282
      %v284 = vpop.f32.mrb[0].mxu0
      %285 = vdwg.mxu0
      %v286 = vld [vmem:[%s2] sm:$0x1]
      %v287 = vld [vmem:[%s2 + $0x1] sm:$0x1]
      %v288 = vmul.f32 %v286, -1e+30
      %v289 = vmul.f32 %v287, -1e+30
      %v290 = vmul.f32 %v186, 0.35355338
      %v291 = vmul.f32 %v191, 0.35355338
      %v294 = vlaneseq
      %v295 = vshrl.u32 %v294, 7
      %v296 = vsub.s32 0, %v295
      %v297 = vrot.slane %v288, %v296
      %v298 = vlaneseq
      %v299 = vshrl.u32 %v298, 7
      %v300 = vsub.s32 0, %v299
      %v301 = vrot.slane %v289, %v300
      %vm304 = vcmask 64512
      %v306 = vsel %vm304, %v290, 0
      %v309 = vsel %vm304, %v278, 0
      %311 = vmatprep.subr.mxu0 0.0
      %312 = vmatpush1.xpose.msra.mxu0 %v309
      %313 = vmatprep.subr.mxu0 0.0
      %314 = vmatpush1.xpose.msra.mxu0 0.0
      %315 = vmatprep.subr.mxu0 0.0
      %316 = vmatpush1.xpose.msra.mxu0 0.0
      %317 = vmatprep.subr.mxu0 0.0
      %318 = vmatpush1.xpose.msra.mxu0 0.0
      %319 = vmatprep.subr.mxu0 0.0
      %320 = vmatpush1.xpose.msra.mxu0 0.0
      %321 = vmatprep.subr.mxu0 0.0
      %322 = vmatpush1.xpose.msra.mxu0 0.0
      %323 = vmatprep.subr.mxu0 0.0
      %324 = vmatpush1.xpose.msra.mxu0 0.0
      %325 = vmatprep.subr.mxu0 0.0
      %326 = vmatpush1.xpose.msra.mxu0 0.0
      %327 = vmatprep.subr.mxu0 0.0
      %328 = vmatpush1.xpose.msra.mxu0 0.0
      %329 = vmatprep.subr.mxu0 0.0
      %330 = vmatpush1.xpose.msra.mxu0 0.0
      %331 = vmatprep.subr.mxu0 0.0
      %332 = vmatpush1.xpose.msra.mxu0 0.0
      %333 = vmatprep.subr.mxu0 0.0
      %334 = vmatpush1.xpose.msra.mxu0 0.0
      %335 = vmatprep.subr.mxu0 0.0
      %336 = vmatpush1.xpose.msra.mxu0 0.0
      %337 = vmatprep.subr.mxu0 0.0
      %338 = vmatpush1.xpose.msra.mxu0 0.0
      %339 = vmatprep.subr.mxu0 0.0
      %340 = vmatpush1.xpose.msra.mxu0 0.0
      %341 = vmatprep.subr.mxu0 0.0
      %342 = vmatpush1.xpose.msra.mxu0 0.0
      %343 = vmatprep.subr.mxu0 0.0
      %344 = vmatpush1.xpose.msra.mxu0 0.0
      %345 = vmatprep.subr.mxu0 0.0
      %346 = vmatpush1.xpose.msra.mxu0 0.0
      %347 = vmatprep.subr.mxu0 0.0
      %348 = vmatpush1.xpose.msra.mxu0 0.0
      %349 = vmatprep.subr.mxu0 0.0
      %350 = vmatpush1.xpose.msra.mxu0 0.0
      %351 = vmatprep.subr.mxu0 0.0
      %352 = vmatpush1.xpose.msra.mxu0 0.0
      %353 = vmatprep.subr.mxu0 0.0
      %354 = vmatpush1.xpose.msra.mxu0 0.0
      %355 = vmatprep.subr.mxu0 0.0
      %356 = vmatpush1.xpose.msra.mxu0 0.0
      %357 = vmatprep.subr.mxu0 0.0
      %358 = vmatpush1.xpose.msra.mxu0 0.0
      %359 = vmatprep.subr.mxu0 0.0
      %360 = vmatpush1.xpose.msra.mxu0 0.0
      %361 = vmatprep.subr.mxu0 0.0
      %362 = vmatpush1.xpose.msra.mxu0 0.0
      %363 = vmatprep.subr.mxu0 0.0
      %364 = vmatpush1.xpose.msra.mxu0 0.0
      %365 = vmatprep.subr.mxu0 0.0
      %366 = vmatpush1.xpose.msra.mxu0 0.0
      %367 = vmatprep.subr.mxu0 0.0
      %368 = vmatpush1.xpose.msra.mxu0 0.0
      %369 = vmatprep.subr.mxu0 0.0
      %370 = vmatpush1.xpose.msra.mxu0 0.0
      %371 = vmatprep.subr.mxu0 0.0
      %372 = vmatpush1.xpose.msra.mxu0 0.0
      %373 = vmatprep.subr.mxu0 0.0
      %374 = vmatpush1.xpose.msra.mxu0 0.0
      %375 = vmatprep.mubr.f32.mxu0 0.0
      %376 = vmatmul.mubr.f32.gmra.mrb[0].mxu0 %v306
      %v377 = vpop.f32.mrb[0].mxu0
      %v378 = vadd.f32 %v297, %v377
      %v379 = vpop.f32.mrb[0].mxu0
      %380 = vdwg.mxu0
      %v382 = vsel %vm304, %v291, 0
      %v385 = vsel %vm304, %v283, 0
      %387 = vmatprep.subr.mxu0 0.0
      %388 = vmatpush1.xpose.msra.mxu0 %v385
      %389 = vmatprep.subr.mxu0 0.0
      %390 = vmatpush1.xpose.msra.mxu0 0.0
      %391 = vmatprep.subr.mxu0 0.0
      %392 = vmatpush1.xpose.msra.mxu0 0.0
      %393 = vmatprep.subr.mxu0 0.0
      %394 = vmatpush1.xpose.msra.mxu0 0.0
      %395 = vmatprep.subr.mxu0 0.0
      %396 = vmatpush1.xpose.msra.mxu0 0.0
      %397 = vmatprep.subr.mxu0 0.0
      %398 = vmatpush1.xpose.msra.mxu0 0.0
      %399 = vmatprep.subr.mxu0 0.0
      %400 = vmatpush1.xpose.msra.mxu0 0.0
      %401 = vmatprep.subr.mxu0 0.0
      %402 = vmatpush1.xpose.msra.mxu0 0.0
      %403 = vmatprep.subr.mxu0 0.0
      %404 = vmatpush1.xpose.msra.mxu0 0.0
      %405 = vmatprep.subr.mxu0 0.0
      %406 = vmatpush1.xpose.msra.mxu0 0.0
      %407 = vmatprep.subr.mxu0 0.0
      %408 = vmatpush1.xpose.msra.mxu0 0.0
      %409 = vmatprep.subr.mxu0 0.0
      %410 = vmatpush1.xpose.msra.mxu0 0.0
      %411 = vmatprep.subr.mxu0 0.0
      %412 = vmatpush1.xpose.msra.mxu0 0.0
      %413 = vmatprep.subr.mxu0 0.0
      %414 = vmatpush1.xpose.msra.mxu0 0.0
      %415 = vmatprep.subr.mxu0 0.0
      %416 = vmatpush1.xpose.msra.mxu0 0.0
      %417 = vmatprep.subr.mxu0 0.0
      %418 = vmatpush1.xpose.msra.mxu0 0.0
      %419 = vmatprep.subr.mxu0 0.0
      %420 = vmatpush1.xpose.msra.mxu0 0.0
      %421 = vmatprep.subr.mxu0 0.0
      %422 = vmatpush1.xpose.msra.mxu0 0.0
      %423 = vmatprep.subr.mxu0 0.0
      %424 = vmatpush1.xpose.msra.mxu0 0.0
      %425 = vmatprep.subr.mxu0 0.0
      %426 = vmatpush1.xpose.msra.mxu0 0.0
      %427 = vmatprep.subr.mxu0 0.0
      %428 = vmatpush1.xpose.msra.mxu0 0.0
      %429 = vmatprep.subr.mxu0 0.0
      %430 = vmatpush1.xpose.msra.mxu0 0.0
      %431 = vmatprep.subr.mxu0 0.0
      %432 = vmatpush1.xpose.msra.mxu0 0.0
      %433 = vmatprep.subr.mxu0 0.0
      %434 = vmatpush1.xpose.msra.mxu0 0.0
      %435 = vmatprep.subr.mxu0 0.0
      %436 = vmatpush1.xpose.msra.mxu0 0.0
      %437 = vmatprep.subr.mxu0 0.0
      %438 = vmatpush1.xpose.msra.mxu0 0.0
      %439 = vmatprep.subr.mxu0 0.0
      %440 = vmatpush1.xpose.msra.mxu0 0.0
      %441 = vmatprep.subr.mxu0 0.0
      %442 = vmatpush1.xpose.msra.mxu0 0.0
      %443 = vmatprep.subr.mxu0 0.0
      %444 = vmatpush1.xpose.msra.mxu0 0.0
      %445 = vmatprep.subr.mxu0 0.0
      %446 = vmatpush1.xpose.msra.mxu0 0.0
      %447 = vmatprep.subr.mxu0 0.0
      %448 = vmatpush1.xpose.msra.mxu0 0.0
      %449 = vmatprep.subr.mxu0 0.0
      %450 = vmatpush1.xpose.msra.mxu0 0.0
      %451 = vmatprep.mubr.f32.mxu0 0.0
      %452 = vmatmul.mubr.f32.gmra.mrb[0].mxu0 %v382
      %v453 = vpop.f32.mrb[0].mxu0
      %v454 = vadd.f32 %v301, %v453
      %v455 = vpop.f32.mrb[0].mxu0
      %456 = vdwg.mxu0
      %v457 = vsel %vm304, %v378, -inf
      %458 = vmax.xlane.f32.xlu0 %v457
      %v459 = vpop.xlane.xlu0 %458
      %v460 = vsel %vm304, %v454, -inf
      %461 = vmax.xlane.f32.xlu0 %v460
      %v462 = vpop.xlane.xlu0 %461
      %v463 = vsub.f32 %v378, %v459
      %v464 = vsub.f32 %v454, %v462
      %v465 = vmul.f32 %v463, 1.442695
      %v466 = vpow.pop %v465
      %v467 = vmul.f32 %v464, 1.442695
      %v468 = vpow.pop %v467
      %v469 = vsel %vm304, %v466, 0.0
      %470 = vadd.xlane.f32.xlu0 %v469
      %v471 = vpop.xlane.xlu0 %470
      %v472 = vsel %vm304, %v468, 0.0
      %473 = vadd.xlane.f32.xlu0 %v472
      %v474 = vpop.xlane.xlu0 %473
      %v475 = vrcp.pop %v471
      %v476 = vrcp.pop %v474
      %v477 = vmul.f32 %v466, %v475
      %v478 = vmul.f32 %v468, %v476
      %v479 = vadd.f32 %v477, 0.0
      %v480 = vadd.f32 %v478, 0.0
      %481 = vset.pattern.permute.xlu0 32
      %482 = vperm.xlu0 %481, %v278
      %v483 = vpop.permute.xlu0 %482
      %484 = vset.pattern.permute.xlu0 32
      %485 = vperm.xlu0 %484, %v283
      %v486 = vpop.permute.xlu0 %485
      %v487 = vlaneseq
      %v488 = vand.u32 %v487, 127
      %v489 = vlaneseq
      %v490 = vshrl.u32 %v489, 7
      %v491 = vsub.s32 %v488, %v490
      %v492 = vrot.slane %v483, %v491
      %v493 = vlaneseq
      %v494 = vshrl.u32 %v493, 7
      %v495 = vsub.s32 %v488, %v494
      %v496 = vrot.slane %v486, %v495
      %vm497 = vcmask 1042434
      %v498 = vsel %vm497, %v492, %v492
      %vm499 = vcmask 1043459
      %v500 = vsel %vm499, %v492, %v498
      %vm501 = vcmask 1044484
      %v502 = vsel %vm501, %v492, %v500
      %vm503 = vcmask 1045509
      %v504 = vsel %vm503, %v492, %v502
      %vm505 = vcmask 1046534
      %v506 = vsel %vm505, %v492, %v504
      %vm507 = vcmask 1047559
      %v508 = vsel %vm507, %v492, %v506
      %v509 = vsel %vm497, %v496, %v496
      %v510 = vsel %vm499, %v496, %v509
      %v511 = vsel %vm501, %v496, %v510
      %v512 = vsel %vm503, %v496, %v511
      %v513 = vsel %vm505, %v496, %v512
      %v514 = vsel %vm507, %v496, %v513
      %v517 = vmul.f32 %v477, %v508
      %v518 = vmul.f32 %v478, %v514
      %v519 = vsel %vm304, %v517, 0.0
      %520 = vadd.xlane.f32.xlu0 %v519
      %v521 = vpop.xlane.xlu0 %520
      %v522 = vsel %vm304, %v518, 0.0
      %523 = vadd.xlane.f32.xlu0 %v522
      %v524 = vpop.xlane.xlu0 %523
      %v525 = vadd.f32 %v521, 0.0
      %v526 = vadd.f32 %v524, 0.0
      %527 = vrot.lane.b32.xlu0 %v290, 120
      %v528 = vpop.permute.xlu0 %527
      %529 = vrot.lane.b32.xlu0 %v278, 120
      %v530 = vpop.permute.xlu0 %529
      %v531 = vsel %vm304, %v528, 0
      %v533 = vsel %vm304, %v530, 0
      %535 = vmatprep.subr.mxu0 0.0
      %536 = vmatpush1.xpose.msra.mxu0 %v533
      %537 = vmatprep.subr.mxu0 0.0
      %538 = vmatpush1.xpose.msra.mxu0 0.0
      %539 = vmatprep.subr.mxu0 0.0
      %540 = vmatpush1.xpose.msra.mxu0 0.0
      %541 = vmatprep.subr.mxu0 0.0
      %542 = vmatpush1.xpose.msra.mxu0 0.0
      %543 = vmatprep.subr.mxu0 0.0
      %544 = vmatpush1.xpose.msra.mxu0 0.0
      %545 = vmatprep.subr.mxu0 0.0
      %546 = vmatpush1.xpose.msra.mxu0 0.0
      %547 = vmatprep.subr.mxu0 0.0
      %548 = vmatpush1.xpose.msra.mxu0 0.0
      %549 = vmatprep.subr.mxu0 0.0
      %550 = vmatpush1.xpose.msra.mxu0 0.0
      %551 = vmatprep.subr.mxu0 0.0
      %552 = vmatpush1.xpose.msra.mxu0 0.0
      %553 = vmatprep.subr.mxu0 0.0
      %554 = vmatpush1.xpose.msra.mxu0 0.0
      %555 = vmatprep.subr.mxu0 0.0
      %556 = vmatpush1.xpose.msra.mxu0 0.0
      %557 = vmatprep.subr.mxu0 0.0
      %558 = vmatpush1.xpose.msra.mxu0 0.0
      %559 = vmatprep.subr.mxu0 0.0
      %560 = vmatpush1.xpose.msra.mxu0 0.0
      %561 = vmatprep.subr.mxu0 0.0
      %562 = vmatpush1.xpose.msra.mxu0 0.0
      %563 = vmatprep.subr.mxu0 0.0
      %564 = vmatpush1.xpose.msra.mxu0 0.0
      %565 = vmatprep.subr.mxu0 0.0
      %566 = vmatpush1.xpose.msra.mxu0 0.0
      %567 = vmatprep.subr.mxu0 0.0
      %568 = vmatpush1.xpose.msra.mxu0 0.0
      %569 = vmatprep.subr.mxu0 0.0
      %570 = vmatpush1.xpose.msra.mxu0 0.0
      %571 = vmatprep.subr.mxu0 0.0
      %572 = vmatpush1.xpose.msra.mxu0 0.0
      %573 = vmatprep.subr.mxu0 0.0
      %574 = vmatpush1.xpose.msra.mxu0 0.0
      %575 = vmatprep.subr.mxu0 0.0
      %576 = vmatpush1.xpose.msra.mxu0 0.0
      %577 = vmatprep.subr.mxu0 0.0
      %578 = vmatpush1.xpose.msra.mxu0 0.0
      %579 = vmatprep.subr.mxu0 0.0
      %580 = vmatpush1.xpose.msra.mxu0 0.0
      %581 = vmatprep.subr.mxu0 0.0
      %582 = vmatpush1.xpose.msra.mxu0 0.0
      %583 = vmatprep.subr.mxu0 0.0
      %584 = vmatpush1.xpose.msra.mxu0 0.0
      %585 = vmatprep.subr.mxu0 0.0
      %586 = vmatpush1.xpose.msra.mxu0 0.0
      %587 = vmatprep.subr.mxu0 0.0
      %588 = vmatpush1.xpose.msra.mxu0 0.0
      %589 = vmatprep.subr.mxu0 0.0
      %590 = vmatpush1.xpose.msra.mxu0 0.0
      %591 = vmatprep.subr.mxu0 0.0
      %592 = vmatpush1.xpose.msra.mxu0 0.0
      %593 = vmatprep.subr.mxu0 0.0
      %594 = vmatpush1.xpose.msra.mxu0 0.0
      %595 = vmatprep.subr.mxu0 0.0
      %596 = vmatpush1.xpose.msra.mxu0 0.0
      %597 = vmatprep.subr.mxu0 0.0
      %598 = vmatpush1.xpose.msra.mxu0 0.0
      %599 = vmatprep.mubr.f32.mxu0 0.0
      %600 = vmatmul.mubr.f32.gmra.mrb[0].mxu0 %v531
      %v601 = vpop.f32.mrb[0].mxu0
      %v602 = vadd.f32 %v297, %v601
      %v603 = vpop.f32.mrb[0].mxu0
      %604 = vdwg.mxu0
      %605 = vrot.lane.b32.xlu0 %v291, 120
      %v606 = vpop.permute.xlu0 %605
      %607 = vrot.lane.b32.xlu0 %v283, 120
      %v608 = vpop.permute.xlu0 %607
      %v609 = vsel %vm304, %v606, 0
      %v611 = vsel %vm304, %v608, 0
      %613 = vmatprep.subr.mxu0 0.0
      %614 = vmatpush1.xpose.msra.mxu0 %v611
      %615 = vmatprep.subr.mxu0 0.0
      %616 = vmatpush1.xpose.msra.mxu0 0.0
      %617 = vmatprep.subr.mxu0 0.0
      %618 = vmatpush1.xpose.msra.mxu0 0.0
      %619 = vmatprep.subr.mxu0 0.0
      %620 = vmatpush1.xpose.msra.mxu0 0.0
      %621 = vmatprep.subr.mxu0 0.0
      %622 = vmatpush1.xpose.msra.mxu0 0.0
      %623 = vmatprep.subr.mxu0 0.0
      %624 = vmatpush1.xpose.msra.mxu0 0.0
      %625 = vmatprep.subr.mxu0 0.0
      %626 = vmatpush1.xpose.msra.mxu0 0.0
      %627 = vmatprep.subr.mxu0 0.0
      %628 = vmatpush1.xpose.msra.mxu0 0.0
      %629 = vmatprep.subr.mxu0 0.0
      %630 = vmatpush1.xpose.msra.mxu0 0.0
      %631 = vmatprep.subr.mxu0 0.0
      %632 = vmatpush1.xpose.msra.mxu0 0.0
      %633 = vmatprep.subr.mxu0 0.0
      %634 = vmatpush1.xpose.msra.mxu0 0.0
      %635 = vmatprep.subr.mxu0 0.0
      %636 = vmatpush1.xpose.msra.mxu0 0.0
      %637 = vmatprep.subr.mxu0 0.0
      %638 = vmatpush1.xpose.msra.mxu0 0.0
      %639 = vmatprep.subr.mxu0 0.0
      %640 = vmatpush1.xpose.msra.mxu0 0.0
      %641 = vmatprep.subr.mxu0 0.0
      %642 = vmatpush1.xpose.msra.mxu0 0.0
      %643 = vmatprep.subr.mxu0 0.0
      %644 = vmatpush1.xpose.msra.mxu0 0.0
      %645 = vmatprep.subr.mxu0 0.0
      %646 = vmatpush1.xpose.msra.mxu0 0.0
      %647 = vmatprep.subr.mxu0 0.0
      %648 = vmatpush1.xpose.msra.mxu0 0.0
      %649 = vmatprep.subr.mxu0 0.0
      %650 = vmatpush1.xpose.msra.mxu0 0.0
      %651 = vmatprep.subr.mxu0 0.0
      %652 = vmatpush1.xpose.msra.mxu0 0.0
      %653 = vmatprep.subr.mxu0 0.0
      %654 = vmatpush1.xpose.msra.mxu0 0.0
      %655 = vmatprep.subr.mxu0 0.0
      %656 = vmatpush1.xpose.msra.mxu0 0.0
      %657 = vmatprep.subr.mxu0 0.0
      %658 = vmatpush1.xpose.msra.mxu0 0.0
      %659 = vmatprep.subr.mxu0 0.0
      %660 = vmatpush1.xpose.msra.mxu0 0.0
      %661 = vmatprep.subr.mxu0 0.0
      %662 = vmatpush1.xpose.msra.mxu0 0.0
      %663 = vmatprep.subr.mxu0 0.0
      %664 = vmatpush1.xpose.msra.mxu0 0.0
      %665 = vmatprep.subr.mxu0 0.0
      %666 = vmatpush1.xpose.msra.mxu0 0.0
      %667 = vmatprep.subr.mxu0 0.0
      %668 = vmatpush1.xpose.msra.mxu0 0.0
      %669 = vmatprep.subr.mxu0 0.0
      %670 = vmatpush1.xpose.msra.mxu0 0.0
      %671 = vmatprep.subr.mxu0 0.0
      %672 = vmatpush1.xpose.msra.mxu0 0.0
      %673 = vmatprep.subr.mxu0 0.0
      %674 = vmatpush1.xpose.msra.mxu0 0.0
      %675 = vmatprep.subr.mxu0 0.0
      %676 = vmatpush1.xpose.msra.mxu0 0.0
      %677 = vmatprep.mubr.f32.mxu0 0.0
      %678 = vmatmul.mubr.f32.gmra.mrb[0].mxu0 %v609
      %v679 = vpop.f32.mrb[0].mxu0
      %v680 = vadd.f32 %v301, %v679
      %v681 = vpop.f32.mrb[0].mxu0
      %682 = vdwg.mxu0
      %v683 = vsel %vm304, %v602, -inf
      %684 = vmax.xlane.f32.xlu0 %v683
      %v685 = vpop.xlane.xlu0 %684
      %v686 = vsel %vm304, %v680, -inf
      %687 = vmax.xlane.f32.xlu0 %v686
      %v688 = vpop.xlane.xlu0 %687
      %v689 = vsub.f32 %v602, %v685
      %v690 = vsub.f32 %v680, %v688
      %v691 = vmul.f32 %v689, 1.442695
      %v692 = vpow.pop %v691
      %v693 = vmul.f32 %v690, 1.442695
      %v694 = vpow.pop %v693
      %v695 = vsel %vm304, %v692, 0.0
      %696 = vadd.xlane.f32.xlu0 %v695
      %v697 = vpop.xlane.xlu0 %696
      %v698 = vsel %vm304, %v694, 0.0
      %699 = vadd.xlane.f32.xlu0 %v698
      %v700 = vpop.xlane.xlu0 %699
      %v701 = vrcp.pop %v697
      %v702 = vrcp.pop %v700
      %v703 = vmul.f32 %v692, %v701
      %v704 = vmul.f32 %v694, %v702
      %v705 = vadd.f32 %v479, %v703
      %v706 = vadd.f32 %v480, %v704
      %707 = vset.pattern.permute.xlu0 33
      %708 = vperm.xlu0 %707, %v278
      %v709 = vpop.permute.xlu0 %708
      %710 = vset.pattern.permute.xlu0 33
      %711 = vperm.xlu0 %710, %v283
      %v712 = vpop.permute.xlu0 %711
      %v713 = vlaneseq
      %v714 = vshrl.u32 %v713, 7
      %v715 = vsub.s32 %v488, %v714
      %v716 = vrot.slane %v709, %v715
      %v717 = vlaneseq
      %v718 = vshrl.u32 %v717, 7
      %v719 = vsub.s32 %v488, %v718
      %v720 = vrot.slane %v712, %v719
      %v721 = vsel %vm497, %v716, %v716
      %v722 = vsel %vm499, %v716, %v721
      %v723 = vsel %vm501, %v716, %v722
      %v724 = vsel %vm503, %v716, %v723
      %v725 = vsel %vm505, %v716, %v724
      %v726 = vsel %vm507, %v716, %v725
      %v727 = vsel %vm497, %v720, %v720
      %v728 = vsel %vm499, %v720, %v727
      %v729 = vsel %vm501, %v720, %v728
      %v730 = vsel %vm503, %v720, %v729
      %v731 = vsel %vm505, %v720, %v730
      %v732 = vsel %vm507, %v720, %v731
      %v735 = vmul.f32 %v703, %v726
      %v736 = vmul.f32 %v704, %v732
      %v737 = vsel %vm304, %v735, 0.0
      %738 = vadd.xlane.f32.xlu0 %v737
      %v739 = vpop.xlane.xlu0 %738
      %v740 = vsel %vm304, %v736, 0.0
      %741 = vadd.xlane.f32.xlu0 %v740
      %v742 = vpop.xlane.xlu0 %741
      %v743 = vadd.f32 %v525, %v739
      %v744 = vadd.f32 %v526, %v742
      %745 = vrot.lane.b32.xlu0 %v290, 112
      %v746 = vpop.permute.xlu0 %745
      %747 = vrot.lane.b32.xlu0 %v278, 112
      %v748 = vpop.permute.xlu0 %747
      %v749 = vsel %vm304, %v746, 0
      %v751 = vsel %vm304, %v748, 0
      %753 = vmatprep.subr.mxu0 0.0
      %754 = vmatpush1.xpose.msra.mxu0 %v751
      %755 = vmatprep.subr.mxu0 0.0
      %756 = vmatpush1.xpose.msra.mxu0 0.0
      %757 = vmatprep.subr.mxu0 0.0
      %758 = vmatpush1.xpose.msra.mxu0 0.0
      %759 = vmatprep.subr.mxu0 0.0
      %760 = vmatpush1.xpose.msra.mxu0 0.0
      %761 = vmatprep.subr.mxu0 0.0
      %762 = vmatpush1.xpose.msra.mxu0 0.0
      %763 = vmatprep.subr.mxu0 0.0
      %764 = vmatpush1.xpose.msra.mxu0 0.0
      %765 = vmatprep.subr.mxu0 0.0
      %766 = vmatpush1.xpose.msra.mxu0 0.0
      %767 = vmatprep.subr.mxu0 0.0
      %768 = vmatpush1.xpose.msra.mxu0 0.0
      %769 = vmatprep.subr.mxu0 0.0
      %770 = vmatpush1.xpose.msra.mxu0 0.0
      %771 = vmatprep.subr.mxu0 0.0
      %772 = vmatpush1.xpose.msra.mxu0 0.0
      %773 = vmatprep.subr.mxu0 0.0
      %774 = vmatpush1.xpose.msra.mxu0 0.0
      %775 = vmatprep.subr.mxu0 0.0
      %776 = vmatpush1.xpose.msra.mxu0 0.0
      %777 = vmatprep.subr.mxu0 0.0
      %778 = vmatpush1.xpose.msra.mxu0 0.0
      %779 = vmatprep.subr.mxu0 0.0
      %780 = vmatpush1.xpose.msra.mxu0 0.0
      %781 = vmatprep.subr.mxu0 0.0
      %782 = vmatpush1.xpose.msra.mxu0 0.0
      %783 = vmatprep.subr.mxu0 0.0
      %784 = vmatpush1.xpose.msra.mxu0 0.0
      %785 = vmatprep.subr.mxu0 0.0
      %786 = vmatpush1.xpose.msra.mxu0 0.0
      %787 = vmatprep.subr.mxu0 0.0
      %788 = vmatpush1.xpose.msra.mxu0 0.0
      %789 = vmatprep.subr.mxu0 0.0
      %790 = vmatpush1.xpose.msra.mxu0 0.0
      %791 = vmatprep.subr.mxu0 0.0
      %792 = vmatpush1.xpose.msra.mxu0 0.0
      %793 = vmatprep.subr.mxu0 0.0
      %794 = vmatpush1.xpose.msra.mxu0 0.0
      %795 = vmatprep.subr.mxu0 0.0
      %796 = vmatpush1.xpose.msra.mxu0 0.0
      %797 = vmatprep.subr.mxu0 0.0
      %798 = vmatpush1.xpose.msra.mxu0 0.0
      %799 = vmatprep.subr.mxu0 0.0
      %800 = vmatpush1.xpose.msra.mxu0 0.0
      %801 = vmatprep.subr.mxu0 0.0
      %802 = vmatpush1.xpose.msra.mxu0 0.0
      %803 = vmatprep.subr.mxu0 0.0
      %804 = vmatpush1.xpose.msra.mxu0 0.0
      %805 = vmatprep.subr.mxu0 0.0
      %806 = vmatpush1.xpose.msra.mxu0 0.0
      %807 = vmatprep.subr.mxu0 0.0
      %808 = vmatpush1.xpose.msra.mxu0 0.0
      %809 = vmatprep.subr.mxu0 0.0
      %810 = vmatpush1.xpose.msra.mxu0 0.0
      %811 = vmatprep.subr.mxu0 0.0
      %812 = vmatpush1.xpose.msra.mxu0 0.0
      %813 = vmatprep.subr.mxu0 0.0
      %814 = vmatpush1.xpose.msra.mxu0 0.0
      %815 = vmatprep.subr.mxu0 0.0
      %816 = vmatpush1.xpose.msra.mxu0 0.0
      %817 = vmatprep.mubr.f32.mxu0 0.0
      %818 = vmatmul.mubr.f32.gmra.mrb[0].mxu0 %v749
      %v819 = vpop.f32.mrb[0].mxu0
      %v820 = vadd.f32 %v297, %v819
      %v821 = vpop.f32.mrb[0].mxu0
      %822 = vdwg.mxu0
      %823 = vrot.lane.b32.xlu0 %v291, 112
      %v824 = vpop.permute.xlu0 %823
      %825 = vrot.lane.b32.xlu0 %v283, 112
      %v826 = vpop.permute.xlu0 %825
      %v827 = vsel %vm304, %v824, 0
      %v829 = vsel %vm304, %v826, 0
      %831 = vmatprep.subr.mxu0 0.0
      %832 = vmatpush1.xpose.msra.mxu0 %v829
      %833 = vmatprep.subr.mxu0 0.0
      %834 = vmatpush1.xpose.msra.mxu0 0.0
      %835 = vmatprep.subr.mxu0 0.0
      %836 = vmatpush1.xpose.msra.mxu0 0.0
      %837 = vmatprep.subr.mxu0 0.0
      %838 = vmatpush1.xpose.msra.mxu0 0.0
      %839 = vmatprep.subr.mxu0 0.0
      %840 = vmatpush1.xpose.msra.mxu0 0.0
      %841 = vmatprep.subr.mxu0 0.0
      %842 = vmatpush1.xpose.msra.mxu0 0.0
      %843 = vmatprep.subr.mxu0 0.0
      %844 = vmatpush1.xpose.msra.mxu0 0.0
      %845 = vmatprep.subr.mxu0 0.0
      %846 = vmatpush1.xpose.msra.mxu0 0.0
      %847 = vmatprep.subr.mxu0 0.0
      %848 = vmatpush1.xpose.msra.mxu0 0.0
      %849 = vmatprep.subr.mxu0 0.0
      %850 = vmatpush1.xpose.msra.mxu0 0.0
      %851 = vmatprep.subr.mxu0 0.0
      %852 = vmatpush1.xpose.msra.mxu0 0.0
      %853 = vmatprep.subr.mxu0 0.0
      %854 = vmatpush1.xpose.msra.mxu0 0.0
      %855 = vmatprep.subr.mxu0 0.0
      %856 = vmatpush1.xpose.msra.mxu0 0.0
      %857 = vmatprep.subr.mxu0 0.0
      %858 = vmatpush1.xpose.msra.mxu0 0.0
      %859 = vmatprep.subr.mxu0 0.0
      %860 = vmatpush1.xpose.msra.mxu0 0.0
      %861 = vmatprep.subr.mxu0 0.0
      %862 = vmatpush1.xpose.msra.mxu0 0.0
      %863 = vmatprep.subr.mxu0 0.0
      %864 = vmatpush1.xpose.msra.mxu0 0.0
      %865 = vmatprep.subr.mxu0 0.0
      %866 = vmatpush1.xpose.msra.mxu0 0.0
      %867 = vmatprep.subr.mxu0 0.0
      %868 = vmatpush1.xpose.msra.mxu0 0.0
      %869 = vmatprep.subr.mxu0 0.0
      %870 = vmatpush1.xpose.msra.mxu0 0.0
      %871 = vmatprep.subr.mxu0 0.0
      %872 = vmatpush1.xpose.msra.mxu0 0.0
      %873 = vmatprep.subr.mxu0 0.0
      %874 = vmatpush1.xpose.msra.mxu0 0.0
      %875 = vmatprep.subr.mxu0 0.0
      %876 = vmatpush1.xpose.msra.mxu0 0.0
      %877 = vmatprep.subr.mxu0 0.0
      %878 = vmatpush1.xpose.msra.mxu0 0.0
      %879 = vmatprep.subr.mxu0 0.0
      %880 = vmatpush1.xpose.msra.mxu0 0.0
      %881 = vmatprep.subr.mxu0 0.0
      %882 = vmatpush1.xpose.msra.mxu0 0.0
      %883 = vmatprep.subr.mxu0 0.0
      %884 = vmatpush1.xpose.msra.mxu0 0.0
      %885 = vmatprep.subr.mxu0 0.0
      %886 = vmatpush1.xpose.msra.mxu0 0.0
      %887 = vmatprep.subr.mxu0 0.0
      %888 = vmatpush1.xpose.msra.mxu0 0.0
      %889 = vmatprep.subr.mxu0 0.0
      %890 = vmatpush1.xpose.msra.mxu0 0.0
      %891 = vmatprep.subr.mxu0 0.0
      %892 = vmatpush1.xpose.msra.mxu0 0.0
      %893 = vmatprep.subr.mxu0 0.0
      %894 = vmatpush1.xpose.msra.mxu0 0.0
      %895 = vmatprep.mubr.f32.mxu0 0.0
      %896 = vmatmul.mubr.f32.gmra.mrb[0].mxu0 %v827
      %v897 = vpop.f32.mrb[0].mxu0
      %v898 = vadd.f32 %v301, %v897
      %v899 = vpop.f32.mrb[0].mxu0
      %900 = vdwg.mxu0
      %v901 = vsel %vm304, %v820, -inf
      %902 = vmax.xlane.f32.xlu0 %v901
      %v903 = vpop.xlane.xlu0 %902
      %v904 = vsel %vm304, %v898, -inf
      %905 = vmax.xlane.f32.xlu0 %v904
      %v906 = vpop.xlane.xlu0 %905
      %v907 = vsub.f32 %v820, %v903
      %v908 = vsub.f32 %v898, %v906
      %v909 = vmul.f32 %v907, 1.442695
      %v910 = vpow.pop %v909
      %v911 = vmul.f32 %v908, 1.442695
      %v912 = vpow.pop %v911
      %v913 = vsel %vm304, %v910, 0.0
      %914 = vadd.xlane.f32.xlu0 %v913
      %v915 = vpop.xlane.xlu0 %914
      %v916 = vsel %vm304, %v912, 0.0
      %917 = vadd.xlane.f32.xlu0 %v916
      %v918 = vpop.xlane.xlu0 %917
      %v919 = vrcp.pop %v915
      %v920 = vrcp.pop %v918
      %v921 = vmul.f32 %v910, %v919
      %v922 = vmul.f32 %v912, %v920
      %v923 = vadd.f32 %v705, %v921
      %v924 = vadd.f32 %v706, %v922
      %925 = vset.pattern.permute.xlu0 34
      %926 = vperm.xlu0 %925, %v278
      %v927 = vpop.permute.xlu0 %926
      %928 = vset.pattern.permute.xlu0 34
      %929 = vperm.xlu0 %928, %v283
      %v930 = vpop.permute.xlu0 %929
      %v931 = vlaneseq
      %v932 = vshrl.u32 %v931, 7
      %v933 = vsub.s32 %v488, %v932
      %v934 = vrot.slane %v927, %v933
      %v935 = vlaneseq
      %v936 = vshrl.u32 %v935, 7
      %v937 = vsub.s32 %v488, %v936
      %v938 = vrot.slane %v930, %v937
      %v939 = vsel %vm497, %v934, %v934
      %v940 = vsel %vm499, %v934, %v939
      %v941 = vsel %vm501, %v934, %v940
      %v942 = vsel %vm503, %v934, %v941
      %v943 = vsel %vm505, %v934, %v942
      %v944 = vsel %vm507, %v934, %v943
      %v945 = vsel %vm497, %v938, %v938
      %v946 = vsel %vm499, %v938, %v945
      %v947 = vsel %vm501, %v938, %v946
      %v948 = vsel %vm503, %v938, %v947
      %v949 = vsel %vm505, %v938, %v948
      %v950 = vsel %vm507, %v938, %v949
      %v953 = vmul.f32 %v921, %v944
      %v954 = vmul.f32 %v922, %v950
      %v955 = vsel %vm304, %v953, 0.0
      %956 = vadd.xlane.f32.xlu0 %v955
      %v957 = vpop.xlane.xlu0 %956
      %v958 = vsel %vm304, %v954, 0.0
      %959 = vadd.xlane.f32.xlu0 %v958
      %v960 = vpop.xlane.xlu0 %959
      %v961 = vadd.f32 %v743, %v957
      %v962 = vadd.f32 %v744, %v960
      %963 = vrot.lane.b32.xlu0 %v290, 104
      %v964 = vpop.permute.xlu0 %963
      %965 = vrot.lane.b32.xlu0 %v278, 104
      %v966 = vpop.permute.xlu0 %965
      %v967 = vsel %vm304, %v964, 0
      %v969 = vsel %vm304, %v966, 0
      %971 = vmatprep.subr.mxu0 0.0
      %972 = vmatpush1.xpose.msra.mxu0 %v969
      %973 = vmatprep.subr.mxu0 0.0
      %974 = vmatpush1.xpose.msra.mxu0 0.0
      %975 = vmatprep.subr.mxu0 0.0
      %976 = vmatpush1.xpose.msra.mxu0 0.0
      %977 = vmatprep.subr.mxu0 0.0
      %978 = vmatpush1.xpose.msra.mxu0 0.0
      %979 = vmatprep.subr.mxu0 0.0
      %980 = vmatpush1.xpose.msra.mxu0 0.0
      %981 = vmatprep.subr.mxu0 0.0
      %982 = vmatpush1.xpose.msra.mxu0 0.0
      %983 = vmatprep.subr.mxu0 0.0
      %984 = vmatpush1.xpose.msra.mxu0 0.0
      %985 = vmatprep.subr.mxu0 0.0
      %986 = vmatpush1.xpose.msra.mxu0 0.0
      %987 = vmatprep.subr.mxu0 0.0
      %988 = vmatpush1.xpose.msra.mxu0 0.0
      %989 = vmatprep.subr.mxu0 0.0
      %990 = vmatpush1.xpose.msra.mxu0 0.0
      %991 = vmatprep.subr.mxu0 0.0
      %992 = vmatpush1.xpose.msra.mxu0 0.0
      %993 = vmatprep.subr.mxu0 0.0
      %994 = vmatpush1.xpose.msra.mxu0 0.0
      %995 = vmatprep.subr.mxu0 0.0
      %996 = vmatpush1.xpose.msra.mxu0 0.0
      %997 = vmatprep.subr.mxu0 0.0
      %998 = vmatpush1.xpose.msra.mxu0 0.0
      %999 = vmatprep.subr.mxu0 0.0
      %1000 = vmatpush1.xpose.msra.mxu0 0.0
      %1001 = vmatprep.subr.mxu0 0.0
      %1002 = vmatpush1.xpose.msra.mxu0 0.0
      %1003 = vmatprep.subr.mxu0 0.0
      %1004 = vmatpush1.xpose.msra.mxu0 0.0
      %1005 = vmatprep.subr.mxu0 0.0
      %1006 = vmatpush1.xpose.msra.mxu0 0.0
      %1007 = vmatprep.subr.mxu0 0.0
      %1008 = vmatpush1.xpose.msra.mxu0 0.0
      %1009 = vmatprep.subr.mxu0 0.0
      %1010 = vmatpush1.xpose.msra.mxu0 0.0
      %1011 = vmatprep.subr.mxu0 0.0
      %1012 = vmatpush1.xpose.msra.mxu0 0.0
      %1013 = vmatprep.subr.mxu0 0.0
      %1014 = vmatpush1.xpose.msra.mxu0 0.0
      %1015 = vmatprep.subr.mxu0 0.0
      %1016 = vmatpush1.xpose.msra.mxu0 0.0
      %1017 = vmatprep.subr.mxu0 0.0
      %1018 = vmatpush1.xpose.msra.mxu0 0.0
      %1019 = vmatprep.subr.mxu0 0.0
      %1020 = vmatpush1.xpose.msra.mxu0 0.0
      %1021 = vmatprep.subr.mxu0 0.0
      %1022 = vmatpush1.xpose.msra.mxu0 0.0
      %1023 = vmatprep.subr.mxu0 0.0
      %1024 = vmatpush1.xpose.msra.mxu0 0.0
      %1025 = vmatprep.subr.mxu0 0.0
      %1026 = vmatpush1.xpose.msra.mxu0 0.0
      %1027 = vmatprep.subr.mxu0 0.0
      %1028 = vmatpush1.xpose.msra.mxu0 0.0
      %1029 = vmatprep.subr.mxu0 0.0
      %1030 = vmatpush1.xpose.msra.mxu0 0.0
      %1031 = vmatprep.subr.mxu0 0.0
      %1032 = vmatpush1.xpose.msra.mxu0 0.0
      %1033 = vmatprep.subr.mxu0 0.0
      %1034 = vmatpush1.xpose.msra.mxu0 0.0
      %1035 = vmatprep.mubr.f32.mxu0 0.0
      %1036 = vmatmul.mubr.f32.gmra.mrb[0].mxu0 %v967
      %v1037 = vpop.f32.mrb[0].mxu0
      %v1038 = vadd.f32 %v297, %v1037
      %v1039 = vpop.f32.mrb[0].mxu0
      %1040 = vdwg.mxu0
      %1041 = vrot.lane.b32.xlu0 %v291, 104
      %v1042 = vpop.permute.xlu0 %1041
      %1043 = vrot.lane.b32.xlu0 %v283, 104
      %v1044 = vpop.permute.xlu0 %1043
      %v1045 = vsel %vm304, %v1042, 0
      %v1047 = vsel %vm304, %v1044, 0
      %1049 = vmatprep.subr.mxu0 0.0
      %1050 = vmatpush1.xpose.msra.mxu0 %v1047
      %1051 = vmatprep.subr.mxu0 0.0
      %1052 = vmatpush1.xpose.msra.mxu0 0.0
      %1053 = vmatprep.subr.mxu0 0.0
      %1054 = vmatpush1.xpose.msra.mxu0 0.0
      %1055 = vmatprep.subr.mxu0 0.0
      %1056 = vmatpush1.xpose.msra.mxu0 0.0
      %1057 = vmatprep.subr.mxu0 0.0
      %1058 = vmatpush1.xpose.msra.mxu0 0.0
      %1059 = vmatprep.subr.mxu0 0.0
      %1060 = vmatpush1.xpose.msra.mxu0 0.0
      %1061 = vmatprep.subr.mxu0 0.0
      %1062 = vmatpush1.xpose.msra.mxu0 0.0
      %1063 = vmatprep.subr.mxu0 0.0
      %1064 = vmatpush1.xpose.msra.mxu0 0.0
      %1065 = vmatprep.subr.mxu0 0.0
      %1066 = vmatpush1.xpose.msra.mxu0 0.0
      %1067 = vmatprep.subr.mxu0 0.0
      %1068 = vmatpush1.xpose.msra.mxu0 0.0
      %1069 = vmatprep.subr.mxu0 0.0
      %1070 = vmatpush1.xpose.msra.mxu0 0.0
      %1071 = vmatprep.subr.mxu0 0.0
      %1072 = vmatpush1.xpose.msra.mxu0 0.0
      %1073 = vmatprep.subr.mxu0 0.0
      %1074 = vmatpush1.xpose.msra.mxu0 0.0
      %1075 = vmatprep.subr.mxu0 0.0
      %1076 = vmatpush1.xpose.msra.mxu0 0.0
      %1077 = vmatprep.subr.mxu0 0.0
      %1078 = vmatpush1.xpose.msra.mxu0 0.0
      %1079 = vmatprep.subr.mxu0 0.0
      %1080 = vmatpush1.xpose.msra.mxu0 0.0
      %1081 = vmatprep.subr.mxu0 0.0
      %1082 = vmatpush1.xpose.msra.mxu0 0.0
      %1083 = vmatprep.subr.mxu0 0.0
      %1084 = vmatpush1.xpose.msra.mxu0 0.0
      %1085 = vmatprep.subr.mxu0 0.0
      %1086 = vmatpush1.xpose.msra.mxu0 0.0
      %1087 = vmatprep.subr.mxu0 0.0
      %1088 = vmatpush1.xpose.msra.mxu0 0.0
      %1089 = vmatprep.subr.mxu0 0.0
      %1090 = vmatpush1.xpose.msra.mxu0 0.0
      %1091 = vmatprep.subr.mxu0 0.0
      %1092 = vmatpush1.xpose.msra.mxu0 0.0
      %1093 = vmatprep.subr.mxu0 0.0
      %1094 = vmatpush1.xpose.msra.mxu0 0.0
      %1095 = vmatprep.subr.mxu0 0.0
      %1096 = vmatpush1.xpose.msra.mxu0 0.0
      %1097 = vmatprep.subr.mxu0 0.0
      %1098 = vmatpush1.xpose.msra.mxu0 0.0
      %1099 = vmatprep.subr.mxu0 0.0
      %1100 = vmatpush1.xpose.msra.mxu0 0.0
      %1101 = vmatprep.subr.mxu0 0.0
      %1102 = vmatpush1.xpose.msra.mxu0 0.0
      %1103 = vmatprep.subr.mxu0 0.0
      %1104 = vmatpush1.xpose.msra.mxu0 0.0
      %1105 = vmatprep.subr.mxu0 0.0
      %1106 = vmatpush1.xpose.msra.mxu0 0.0
      %1107 = vmatprep.subr.mxu0 0.0
      %1108 = vmatpush1.xpose.msra.mxu0 0.0
      %1109 = vmatprep.subr.mxu0 0.0
      %1110 = vmatpush1.xpose.msra.mxu0 0.0
      %1111 = vmatprep.subr.mxu0 0.0
      %1112 = vmatpush1.xpose.msra.mxu0 0.0
      %1113 = vmatprep.mubr.f32.mxu0 0.0
      %1114 = vmatmul.mubr.f32.gmra.mrb[0].mxu0 %v1045
      %v1115 = vpop.f32.mrb[0].mxu0
      %v1116 = vadd.f32 %v301, %v1115
      %v1117 = vpop.f32.mrb[0].mxu0
      %1118 = vdwg.mxu0
      %v1119 = vsel %vm304, %v1038, -inf
      %1120 = vmax.xlane.f32.xlu0 %v1119
      %v1121 = vpop.xlane.xlu0 %1120
      %v1122 = vsel %vm304, %v1116, -inf
      %1123 = vmax.xlane.f32.xlu0 %v1122
      %v1124 = vpop.xlane.xlu0 %1123
      %v1125 = vsub.f32 %v1038, %v1121
      %v1126 = vsub.f32 %v1116, %v1124
      %v1127 = vmul.f32 %v1125, 1.442695
      %v1128 = vpow.pop %v1127
      %v1129 = vmul.f32 %v1126, 1.442695
      %v1130 = vpow.pop %v1129
      %v1131 = vsel %vm304, %v1128, 0.0
      %1132 = vadd.xlane.f32.xlu0 %v1131
      %v1133 = vpop.xlane.xlu0 %1132
      %v1134 = vsel %vm304, %v1130, 0.0
      %1135 = vadd.xlane.f32.xlu0 %v1134
      %v1136 = vpop.xlane.xlu0 %1135
      %v1137 = vrcp.pop %v1133
      %v1138 = vrcp.pop %v1136
      %v1139 = vmul.f32 %v1128, %v1137
      %v1140 = vmul.f32 %v1130, %v1138
      %v1141 = vadd.f32 %v923, %v1139
      %v1142 = vadd.f32 %v924, %v1140
      %1143 = vset.pattern.permute.xlu0 35
      %1144 = vperm.xlu0 %1143, %v278
      %v1145 = vpop.permute.xlu0 %1144
      %1146 = vset.pattern.permute.xlu0 35
      %1147 = vperm.xlu0 %1146, %v283
      %v1148 = vpop.permute.xlu0 %1147
      %v1149 = vlaneseq
      %v1150 = vshrl.u32 %v1149, 7
      %v1151 = vsub.s32 %v488, %v1150
      %v1152 = vrot.slane %v1145, %v1151
      %v1153 = vlaneseq
      %v1154 = vshrl.u32 %v1153, 7
      %v1155 = vsub.s32 %v488, %v1154
      %v1156 = vrot.slane %v1148, %v1155
      %v1157 = vsel %vm497, %v1152, %v1152
      %v1158 = vsel %vm499, %v1152, %v1157
      %v1159 = vsel %vm501, %v1152, %v1158
      %v1160 = vsel %vm503, %v1152, %v1159
      %v1161 = vsel %vm505, %v1152, %v1160
      %v1162 = vsel %vm507, %v1152, %v1161
      %v1163 = vsel %vm497, %v1156, %v1156
      %v1164 = vsel %vm499, %v1156, %v1163
      %v1165 = vsel %vm501, %v1156, %v1164
      %v1166 = vsel %vm503, %v1156, %v1165
      %v1167 = vsel %vm505, %v1156, %v1166
      %v1168 = vsel %vm507, %v1156, %v1167
      %v1171 = vmul.f32 %v1139, %v1162
      %v1172 = vmul.f32 %v1140, %v1168
      %v1173 = vsel %vm304, %v1171, 0.0
      %1174 = vadd.xlane.f32.xlu0 %v1173
      %v1175 = vpop.xlane.xlu0 %1174
      %v1176 = vsel %vm304, %v1172, 0.0
      %1177 = vadd.xlane.f32.xlu0 %v1176
      %v1178 = vpop.xlane.xlu0 %1177
      %v1179 = vadd.f32 %v961, %v1175
      %v1180 = vadd.f32 %v962, %v1178
      %v1181 = vld [vmem:[#allocation4] sm:$0x1]
      %v1183 = vlaneseq
      %v1184 = vshrl.u32 %v1183, 7
      %v1185 = vsub.s32 0, %v1184
      %v1186 = vrot.slane %v1181, %v1185
      %v1188 = vadd.f32 %v1179, %v1186
      %v1189 = vadd.f32 %v1180, %v1186
      %v1190 = vxor.u32 %v1188, 2147483648
      %v1191 = vxor.u32 %v1189, 2147483648
      %v1192 = vmul.f32 %v1190, 1.442695
      %v1193 = vpow.pop %v1192
      %v1194 = vmul.f32 %v1191, 1.442695
      %v1195 = vpow.pop %v1194
      %v1196 = vadd.f32 %v1193, 1.0
      %v1197 = vadd.f32 %v1195, 1.0
      %v1198 = vrcp.pop %v1196
      %v1199 = vmul.f32 1.0, %v1198
      %v1200 = vrcp.pop %v1197
      %v1201 = vmul.f32 1.0, %v1200
      %vm1202 = vcmask 7168
      %1203 = vst.msk [vmem:[#allocation2] sm:$0xff] %vm1202, %v1199
      %1204 = vst.msk [vmem:[#allocation2 + $0x8] sm:$0xff] %vm1202, %v1201
      %v1205 = vsub.f32 1.0, %v1199
      %v1206 = vsub.f32 1.0, %v1201
      %v1207 = vmul.f32 %v1205, 0.25
      %v1208 = vmul.f32 %v1206, 0.25
      %1210 = vset.pattern.permute.xlu0 0
      %1211 = vperm.xlu0 %1210, %v1207
      %v1212 = vpop.permute.xlu0 %1211
      %1215 = vset.pattern.permute.xlu0 0
      %1216 = vperm.xlu0 %1215, %v1208
      %v1217 = vpop.permute.xlu0 %1216
      %v1219 = vmul.f32 %v1212, %v1141
      %v1220 = vmul.f32 %v1217, %v1142
      %1221 = vst.msk [vmem:[#allocation3] sm:$0xff] %vm304, %v1219
      %1222 = vst.msk [vmem:[#allocation3 + $0x8] sm:$0xff] %vm304, %v1220
    $region61: #{tpu_custom_call.1} parent=1 // pred_fallthru
      _
    %v1223 = vld [vmem:[#allocation2] sm:$0xff]
    %v1224 = vld [vmem:[#allocation2 + $0x8] sm:$0xff]
    %v1225 = vld [vmem:[#allocation3] sm:$0xff]
    %v1226 = vld [vmem:[#allocation3 + $0x8] sm:$0xff]
    %v1227 = vld [vmem:[%s3] sm:$0xff]
    %v1228 = vld [vmem:[%s3 + $0x8] sm:$0xff]
    %v1229 = vlaneseq
    %v1230 = vand.u32 %v1229, 127
    %s1231 = smul.u32 0, 128
    %v1232 = vstv %s1231
    %v1233 = vadd.s32 %v1230, %v1232
    %1234 = vset.pattern.permute.xlu0 0
    %1235 = vperm.xlu0 %1234, %v1227
    %v1236 = vpop.permute.xlu0 %1235
    %1237 = vset.pattern.permute.xlu0 0
    %1238 = vperm.xlu0 %1237, %v1228
    %v1239 = vpop.permute.xlu0 %1238
    %vm1240 = vcmp.eq.s32.totalorder %v1233, %v1236
    %vm1241 = vcmp.eq.s32.totalorder %v1233, %v1239
    %v1242 = vsel %vm1240, 1, 0
    %v1243 = vsel %vm1241, 1, 0
    %v1244 = vcvt.s32.f32 %v1242
    %v1245 = vcvt.s32.f32 %v1243
    %vm1246 = vcmask 64512
    %v1248 = vsel %vm1246, %v1225, 0
    %1250 = vmatprep.subr.mxu0 0.0
    %1251 = vmatpush1.msra.mxu0 %v1244
    %1252 = vmatprep.subr.mxu0 0.0
    %1253 = vmatpush1.msra.mxu0 0.0
    %1254 = vmatprep.subr.mxu0 0.0
    %1255 = vmatpush1.msra.mxu0 0.0
    %1256 = vmatprep.subr.mxu0 0.0
    %1257 = vmatpush1.msra.mxu0 0.0
    %1258 = vmatprep.subr.mxu0 0.0
    %1259 = vmatpush1.msra.mxu0 0.0
    %1260 = vmatprep.subr.mxu0 0.0
    %1261 = vmatpush1.msra.mxu0 0.0
    %1262 = vmatprep.subr.mxu0 0.0
    %1263 = vmatpush1.msra.mxu0 0.0
    %1264 = vmatprep.subr.mxu0 0.0
    %1265 = vmatpush1.msra.mxu0 0.0
    %1266 = vmatprep.subr.mxu0 0.0
    %1267 = vmatpush1.msra.mxu0 0.0
    %1268 = vmatprep.subr.mxu0 0.0
    %1269 = vmatpush1.msra.mxu0 0.0
    %1270 = vmatprep.subr.mxu0 0.0
    %1271 = vmatpush1.msra.mxu0 0.0
    %1272 = vmatprep.subr.mxu0 0.0
    %1273 = vmatpush1.msra.mxu0 0.0
    %1274 = vmatprep.subr.mxu0 0.0
    %1275 = vmatpush1.msra.mxu0 0.0
    %1276 = vmatprep.subr.mxu0 0.0
    %1277 = vmatpush1.msra.mxu0 0.0
    %1278 = vmatprep.subr.mxu0 0.0
    %1279 = vmatpush1.msra.mxu0 0.0
    %1280 = vmatprep.subr.mxu0 0.0
    %1281 = vmatpush1.msra.mxu0 0.0
    %1282 = vmatprep.subr.mxu0 0.0
    %1283 = vmatpush1.msra.mxu0 0.0
    %1284 = vmatprep.subr.mxu0 0.0
    %1285 = vmatpush1.msra.mxu0 0.0
    %1286 = vmatprep.subr.mxu0 0.0
    %1287 = vmatpush1.msra.mxu0 0.0
    %1288 = vmatprep.subr.mxu0 0.0
    %1289 = vmatpush1.msra.mxu0 0.0
    %1290 = vmatprep.subr.mxu0 0.0
    %1291 = vmatpush1.msra.mxu0 0.0
    %1292 = vmatprep.subr.mxu0 0.0
    %1293 = vmatpush1.msra.mxu0 0.0
    %1294 = vmatprep.subr.mxu0 0.0
    %1295 = vmatpush1.msra.mxu0 0.0
    %1296 = vmatprep.subr.mxu0 0.0
    %1297 = vmatpush1.msra.mxu0 0.0
    %1298 = vmatprep.subr.mxu0 0.0
    %1299 = vmatpush1.msra.mxu0 0.0
    %1300 = vmatprep.subr.mxu0 0.0
    %1301 = vmatpush1.msra.mxu0 0.0
    %1302 = vmatprep.subr.mxu0 0.0
    %1303 = vmatpush1.msra.mxu0 0.0
    %1304 = vmatprep.subr.mxu0 0.0
    %1305 = vmatpush1.msra.mxu0 0.0
    %1306 = vmatprep.subr.mxu0 0.0
    %1307 = vmatpush1.msra.mxu0 0.0
    %1308 = vmatprep.subr.mxu0 0.0
    %1309 = vmatpush1.msra.mxu0 0.0
    %1310 = vmatprep.subr.mxu0 0.0
    %1311 = vmatpush1.msra.mxu0 0.0
    %1312 = vmatprep.subr.mxu0 0.0
    %1313 = vmatpush1.msra.mxu0 0.0
    %1314 = vmatprep.mubr.f32.mxu0 0.0
    %1315 = vmatmul.mubr.f32.gmra.mrb[0].mxu0 %v1248
    %v1316 = vpop.f32.mrb[0].mxu0
    %v1317 = vadd.f32 0.0, %v1316
    %v1318 = vpop.f32.mrb[0].mxu0
    %1319 = vdwg.mxu0
    %v1321 = vsel %vm1246, %v1226, 0
    %1323 = vmatprep.subr.mxu0 0.0
    %1324 = vmatpush1.msra.mxu0 %v1245
    %1325 = vmatprep.subr.mxu0 0.0
    %1326 = vmatpush1.msra.mxu0 0.0
    %1327 = vmatprep.subr.mxu0 0.0
    %1328 = vmatpush1.msra.mxu0 0.0
    %1329 = vmatprep.subr.mxu0 0.0
    %1330 = vmatpush1.msra.mxu0 0.0
    %1331 = vmatprep.subr.mxu0 0.0
    %1332 = vmatpush1.msra.mxu0 0.0
    %1333 = vmatprep.subr.mxu0 0.0
    %1334 = vmatpush1.msra.mxu0 0.0
    %1335 = vmatprep.subr.mxu0 0.0
    %1336 = vmatpush1.msra.mxu0 0.0
    %1337 = vmatprep.subr.mxu0 0.0
    %1338 = vmatpush1.msra.mxu0 0.0
    %1339 = vmatprep.subr.mxu0 0.0
    %1340 = vmatpush1.msra.mxu0 0.0
    %1341 = vmatprep.subr.mxu0 0.0
    %1342 = vmatpush1.msra.mxu0 0.0
    %1343 = vmatprep.subr.mxu0 0.0
    %1344 = vmatpush1.msra.mxu0 0.0
    %1345 = vmatprep.subr.mxu0 0.0
    %1346 = vmatpush1.msra.mxu0 0.0
    %1347 = vmatprep.subr.mxu0 0.0
    %1348 = vmatpush1.msra.mxu0 0.0
    %1349 = vmatprep.subr.mxu0 0.0
    %1350 = vmatpush1.msra.mxu0 0.0
    %1351 = vmatprep.subr.mxu0 0.0
    %1352 = vmatpush1.msra.mxu0 0.0
    %1353 = vmatprep.subr.mxu0 0.0
    %1354 = vmatpush1.msra.mxu0 0.0
    %1355 = vmatprep.subr.mxu0 0.0
    %1356 = vmatpush1.msra.mxu0 0.0
    %1357 = vmatprep.subr.mxu0 0.0
    %1358 = vmatpush1.msra.mxu0 0.0
    %1359 = vmatprep.subr.mxu0 0.0
    %1360 = vmatpush1.msra.mxu0 0.0
    %1361 = vmatprep.subr.mxu0 0.0
    %1362 = vmatpush1.msra.mxu0 0.0
    %1363 = vmatprep.subr.mxu0 0.0
    %1364 = vmatpush1.msra.mxu0 0.0
    %1365 = vmatprep.subr.mxu0 0.0
    %1366 = vmatpush1.msra.mxu0 0.0
    %1367 = vmatprep.subr.mxu0 0.0
    %1368 = vmatpush1.msra.mxu0 0.0
    %1369 = vmatprep.subr.mxu0 0.0
    %1370 = vmatpush1.msra.mxu0 0.0
    %1371 = vmatprep.subr.mxu0 0.0
    %1372 = vmatpush1.msra.mxu0 0.0
    %1373 = vmatprep.subr.mxu0 0.0
    %1374 = vmatpush1.msra.mxu0 0.0
    %1375 = vmatprep.subr.mxu0 0.0
    %1376 = vmatpush1.msra.mxu0 0.0
    %1377 = vmatprep.subr.mxu0 0.0
    %1378 = vmatpush1.msra.mxu0 0.0
    %1379 = vmatprep.subr.mxu0 0.0
    %1380 = vmatpush1.msra.mxu0 0.0
    %1381 = vmatprep.subr.mxu0 0.0
    %1382 = vmatpush1.msra.mxu0 0.0
    %1383 = vmatprep.subr.mxu0 0.0
    %1384 = vmatpush1.msra.mxu0 0.0
    %1385 = vmatprep.subr.mxu0 0.0
    %1386 = vmatpush1.msra.mxu0 0.0
    %1387 = vmatprep.mubr.f32.mxu0 0.0
    %1388 = vmatmul.mubr.f32.gmra.mrb[0].mxu0 %v1321
    %v1389 = vpop.f32.mrb[0].mxu0
    %v1390 = vadd.f32 0.0, %v1389
    %v1391 = vpop.f32.mrb[0].mxu0
    %1392 = vdwg.mxu0
    %v1393 = vld [vmem:[#allocation10] sm:$0xff]
    %v1394 = vld [vmem:[#allocation10 + $0x8] sm:$0xff]
    %1396 = vset.pattern.permute.xlu0 0
    %1397 = vperm.xlu0 %1396, %v1223
    %v1398 = vpop.permute.xlu0 %1397
    %1401 = vset.pattern.permute.xlu0 0
    %1402 = vperm.xlu0 %1401, %v1224
    %v1403 = vpop.permute.xlu0 %1402
    %v1405 = vmul.f32 %v1398, %v1393
    %v1406 = vmul.f32 %v1403, %v1394
    %v1407 = vadd.f32 %v1405, %v1317
    %v1408 = vadd.f32 %v1406, %v1390
    %1409 = vst [vmem:[#allocation13] sm:$0xff] %v1407
    %1410 = vst [vmem:[#allocation13 + $0x8] sm:$0xff] %v1408
    // Predicated region
    $region62: #{tpu_custom_call.1} parent=1 // pred_check
      _
    $region63: #{tpu_custom_call.1} parent=1 // pred_check_branch
      %1412 = sbr.rel (0) target = $region65
    $region64: #{tpu_custom_call.1} parent=1 // pred_region
      %s1414 = ssub.s32 256, 256
      %1415 = vsyncadd [#allocation7], %s1414
      %s1416 = sshll.u32 [#allocation13], 4
      %s1417 = int_to_ptr.vmem [resolvable:$true] %s1416
      %1422 = dma.vmem_to_hbm [thread:$0]  %s1417, 256, %s10, [#allocation7], 128, 128, 8
    $region65: #{tpu_custom_call.1} parent=1 // pred_fallthru
      _
    // Predicated region
    $region66: #{tpu_custom_call.1} parent=1 // pred_check
      _
    $region67: #{tpu_custom_call.1} parent=1 // pred_check_branch
      %1424 = sbr.rel (0) target = $region69
    $region68: #{tpu_custom_call.1} parent=1 // pred_region
      %1425 = dma.done [#allocation7], 256
    $region69: #{tpu_custom_call.1} parent=1 // pred_fallthru
      _
    %1426 = vsyncpa [#allocation6], 1
    %1427 = vsyncpa [#allocation9], 1
    %1428 = vsyncpa [#allocation12], 1
    %1429 = vsyncpa [#allocation7], 1

</llo_original>
